<compile_context>
chip_gen: v6e
topology: v6e:2x2x1
jax: 0.10.0
libtpu: 0.0.40
codegen_flags: <defaults>
</compile_context>

<pallas_src>
import functools

import jax
import jax.numpy as jnp
from jax import lax
from jax.experimental import pallas as pl
from jax.experimental.pallas import tpu as pltpu


def _round_up(n, m):
    return ((n + m - 1) // m) * m


def _vmem_limit_bytes():
    """Per-generation scoped-VMEM limit (v7x: 64 MiB phys, v5e/v6e: 128 MiB)."""
    try:
        cap = int(pltpu.get_tpu_info().vmem_capacity_bytes)
    except Exception:
        cap = 64 * 1024 * 1024          # conservative (v7x-sized) fallback
    limit = min(cap - 16 * 1024 * 1024, 100 * 1024 * 1024)
    return max(limit, 32 * 1024 * 1024)


def _choose_tiles(B, T, Hp, F, vmem_budget):
    """Pick (Bp, B_tile, Tc) under the VMEM budget."""
    Bp = _round_up(B, 8)
    if Bp <= 8:
        b_tile = Bp
    else:
        # >= 2 batch tiles so the 'parallel' axis can feed both TCs (v7x),
        # while keeping tiles tall for MXU fill (cap at 256 rows).
        b_tile = min(256, _round_up((Bp + 1) // 2, 8))
    Bp = _round_up(Bp, b_tile)

    # Per-grid-step VMEM (bytes):
    #   resident weights/bias (single copy) + h/c scratch + resident out block
    fixed = (F * 4 * Hp * 4 + Hp * 4 * Hp * 2 + 4 * Hp * 4
             + 3 * b_tile * Hp * 4)
    #   per timestep: chunk gates scratch (f32) + double-buffered x block
    per_t = b_tile * 4 * Hp * 4 + 2 * b_tile * max(F, 128) * 4
    tc_cap = max(1, (vmem_budget - fixed) // per_t)
    Tc = int(min(T, 32, tc_cap))
    return Bp, b_tile, Tc


def _lstm_kernel(x_ref, wih_ref, whh_ref, bias_ref, h_out_ref,
                 gx_sc, h_sc, c_sc, *, tc_last, unroll):
    """One grid step = up to Tc timesteps of the LSTM cell for one batch tile.

    x_ref   : (Tc, B_tile, F)    f32   raw inputs for this time chunk
    wih_ref : (F, 4*Hp)          f32   input->gates weight (VMEM resident)
    whh_ref : (Hp, 4*Hp)         bf16  hidden->gates weight (VMEM resident)
    bias_ref: (1, 4*Hp)          f32   b_ih + b_hh (VMEM resident)
    h_out   : (B_tile, Hp)       f32   final hidden state (written on last chunk)
    gx_sc   : (Tc, B_tile, 4*Hp) f32   chunk x-projection scratch
    h_sc/c_sc: (B_tile, Hp)      f32   persistent recurrent state
    """
    Tc, B_tile, F = x_ref.shape
    Hp = h_sc.shape[-1]
    t_chunk = pl.program_id(1)
    n_chunks = pl.num_programs(1)

    @pl.when(t_chunk == 0)
    def _():
        h_sc[...] = jnp.zeros_like(h_sc)
        c_sc[...] = jnp.zeros_like(c_sc)

    # Fused x-projection for the whole chunk: one MXU matmul + bias, no gates_x
    # round-trip through HBM.
    x2 = x_ref[...].reshape(Tc * B_tile, F)
    gx2 = jnp.dot(x2, wih_ref[...],
                  preferred_element_type=jnp.float32) + bias_ref[...]
    gx_sc[...] = gx2.reshape(Tc, B_tile, 4 * Hp)

    def cell(i, carry):
        h, c = carry
        # gates = gates_x[t] + h_prev @ W_hh^T  (bf16 MXU operands, f32 acc).
        # W_hh is read from VMEM each step (no huge hoisted vreg live range).
        gates = gx_sc[i] + jnp.dot(h.astype(jnp.bfloat16), whh_ref[...],
                                   preferred_element_type=jnp.float32)
        # sigmoid(x) = 0.5*tanh(0.5*x) + 0.5 -> one EUP push per element;
        # i|f activations computed on one contiguous lane-aligned slab.
        if_g = 0.5 * jnp.tanh(0.5 * gates[:, 0:2 * Hp]) + 0.5
        i_g = if_g[:, 0:Hp]
        f_g = if_g[:, Hp:2 * Hp]
        g_g = jnp.tanh(gates[:, 2 * Hp:3 * Hp])
        o_g = 0.5 * jnp.tanh(0.5 * gates[:, 3 * Hp:4 * Hp]) + 0.5
        c = f_g * c + i_g * g_g
        h = o_g * jnp.tanh(c)
        return h, c

    # TODO(synk): on v6e/v7x, a bf16 activation path (cast `gates` to bf16,
    # keep c in f32) halves EUP pushes; kept f32 here for accuracy.
    def run_steps(n_steps):
        h_new, c_new = lax.fori_loop(0, n_steps, cell,
                                     (h_sc[...], c_sc[...]),
                                     unroll=min(unroll, n_steps))
        h_sc[...] = h_new
        c_sc[...] = c_new

    if tc_last == Tc:
        run_steps(Tc)
    else:
        # Ragged final chunk: static trip counts on both paths keep unrolling.
        @pl.when(t_chunk != n_chunks - 1)
        def _():
            run_steps(Tc)

        @pl.when(t_chunk == n_chunks - 1)
        def _():
            run_steps(tc_last)

    @pl.when(t_chunk == n_chunks - 1)
    def _():
        h_out_ref[...] = h_sc[...]


def com_lstm_forward(x, params):
    """x: (B, T, F) -> (B, output_size), matching comLSTM.forward."""
    w_ih, w_hh, b_ih, b_hh, w_fc, b_fc = params
    x = x.astype(jnp.float32)
    B, T, F = x.shape
    H = w_hh.shape[1]

    Hp = _round_up(H, 128)                       # lane-aligned per-gate width
    vmem_limit = _vmem_limit_bytes()
    Bp, B_tile, Tc = _choose_tiles(B, T, Hp, F, vmem_limit - 8 * 1024 * 1024)
    n_chunks = -(-T // Tc)
    Tp = n_chunks * Tc
    tc_last = T - (n_chunks - 1) * Tc            # length of last (ragged) chunk

    # ---- pack weights with per-gate padding (gate k occupies cols [k*Hp, k*Hp+H))
    wih4 = jnp.pad(w_ih.astype(jnp.float32).reshape(4, H, F),
                   ((0, 0), (0, Hp - H), (0, 0)))
    wih_t = wih4.transpose(2, 0, 1).reshape(F, 4 * Hp)               # (F, 4Hp) f32

    whh4 = jnp.pad(w_hh.astype(jnp.float32).reshape(4, H, H),
                   ((0, 0), (0, Hp - H), (0, Hp - H)))
    whh_t = whh4.transpose(2, 0, 1).reshape(Hp, 4 * Hp).astype(jnp.bfloat16)

    bias = jnp.pad((b_ih + b_hh).astype(jnp.float32).reshape(4, H),
                   ((0, 0), (0, Hp - H))).reshape(1, 4 * Hp)

    # ---- time-major input, padded on batch and (tail of) time. Padded hidden
    # columns stay exactly zero through the recurrence; padded timesteps are
    # never executed (ragged last chunk runs only tc_last steps).
    x_tbf = jnp.transpose(x, (1, 0, 2))
    x_tbf = jnp.pad(x_tbf, ((0, Tp - T), (0, Bp - B), (0, 0)))        # (Tp, Bp, F)

    kern = functools.partial(_lstm_kernel, tc_last=tc_last, unroll=8)
    h_last = pl.pallas_call(
        kern,
        out_shape=jax.ShapeDtypeStruct((Bp, Hp), jnp.float32),
        grid_spec=pltpu.PrefetchScalarGridSpec(
            num_scalar_prefetch=0,
            grid=(Bp // B_tile, n_chunks),
            in_specs=[
                pl.BlockSpec((Tc, B_tile, F), lambda b, t: (t, b, 0)),
                # Constant-index weights/bias: fully VMEM-resident, single copy
                # (no double-buffering of blocks that never change).
                pl.BlockSpec(memory_space=pltpu.MemorySpace.VMEM),
                pl.BlockSpec(memory_space=pltpu.MemorySpace.VMEM),
                pl.BlockSpec(memory_space=pltpu.MemorySpace.VMEM),
            ],
            out_specs=pl.BlockSpec((B_tile, Hp), lambda b, t: (b, 0)),
            scratch_shapes=[
                pltpu.VMEM((Tc, B_tile, 4 * Hp), jnp.float32),   # chunk gates_x
                pltpu.VMEM((B_tile, Hp), jnp.float32),           # h state
                pltpu.VMEM((B_tile, Hp), jnp.float32),           # c state
            ],
        ),
        compiler_params=pltpu.CompilerParams(
            dimension_semantics=("parallel", "arbitrary"),
            vmem_limit_bytes=vmem_limit,
        ),
    )(x_tbf, wih_t, whh_t, bias)

    # ---- tiny FC on the real (B, H) slice, outside the kernel (no degenerate
    # (H, 1) matmul in VMEM; lane-dense kernel output).
    h_last = h_last[:B, :H]
    return h_last @ w_fc.astype(jnp.float32).T + b_fc.astype(jnp.float32)


def init_params(key, n_features, hidden_dim, output_size):
    """Deterministic init matching nn.LSTM / nn.Linear parameter shapes."""
    k = jax.random.split(key, 6)
    s = 1.0 / jnp.sqrt(hidden_dim)
    w_ih = jax.random.uniform(k[0], (4 * hidden_dim, n_features),
                              minval=-s, maxval=s, dtype=jnp.float32)
    w_hh = jax.random.uniform(k[1], (4 * hidden_dim, hidden_dim),
                              minval=-s, maxval=s, dtype=jnp.float32)
    b_ih = jax.random.uniform(k[2], (4 * hidden_dim,),
                              minval=-s, maxval=s, dtype=jnp.float32)
    b_hh = jax.random.uniform(k[3], (4 * hidden_dim,),
                              minval=-s, maxval=s, dtype=jnp.float32)
    w_fc = jax.random.uniform(k[4], (output_size, hidden_dim),
                              minval=-s, maxval=s, dtype=jnp.float32)
    b_fc = jax.random.uniform(k[5], (output_size,),
                              minval=-s, maxval=s, dtype=jnp.float32)
    return w_ih, w_hh, b_ih, b_hh, w_fc, b_fc


def _reference_forward(x, params):
    """Pure-JAX f32 reference of comLSTM.forward for a correctness check."""
    w_ih, w_hh, b_ih, b_hh, w_fc, b_fc = params
    x = x.astype(jnp.float32)
    B, T, F = x.shape
    H = w_hh.shape[1]
    h = jnp.zeros((B, H), jnp.float32)
    c = jnp.zeros((B, H), jnp.float32)
    for t in range(T):
        gates = x[:, t, :] @ w_ih.T + h @ w_hh.T + b_ih + b_hh
        i = jax.nn.sigmoid(gates[:, 0 * H:1 * H])
        f = jax.nn.sigmoid(gates[:, 1 * H:2 * H])
        g = jnp.tanh(gates[:, 2 * H:3 * H])
        o = jax.nn.sigmoid(gates[:, 3 * H:4 * H])
        c = f * c + i * g
        h = o * jnp.tanh(c)
    return h @ w_fc.T + b_fc


if __name__ == "__main__":
    B, T, F = 2, 8, 4          # batch, seq len, n_features
    H, O = 32, 1               # hidden_dim, output_size

    key = jax.random.PRNGKey(0)
    kx, kp = jax.random.split(key)
    x = jax.random.normal(kx, (B, T, F), dtype=jnp.float32)
    params = init_params(kp, F, H, O)

    fwd = jax.jit(com_lstm_forward)
    out = jax.block_until_ready(fwd(x, params))

    ref = _reference_forward(x, params)
    assert out.shape == (B, O)
    # bf16 MXU operands in the recurrence -> slightly relaxed tolerance vs f32 ref.
    # TODO(synk): for very long sequences, validate bf16-h drift at production T
    # (an all-f32 recurrent-matmul path is a drop-in accuracy fallback).
    assert jnp.allclose(out, ref, atol=2e-2, rtol=2e-2)
    print("KERNEL_OK")
</pallas_src>

<mosaic_0001>
module attributes {stable_mosaic.version = 11 : i64} {
  func.func @_lstm_kernel(%arg0: i32, %arg1: i32, %arg2: memref<8x8x4xf32, #tpu.memory_space<vmem>>, %arg3: memref<4x512xf32, #tpu.memory_space<vmem>>, %arg4: memref<128x512xbf16, #tpu.memory_space<vmem>>, %arg5: memref<1x512xf32, #tpu.memory_space<vmem>>, %arg6: memref<8x128xf32, #tpu.memory_space<vmem>>, %arg7: memref<8x8x512xf32, #tpu.memory_space<vmem>>, %arg8: memref<8x128xf32, #tpu.memory_space<vmem>>, %arg9: memref<8x128xf32, #tpu.memory_space<vmem>>) attributes {dimension_semantics = [#tpu.dimension_semantics<parallel>, #tpu.dimension_semantics<arbitrary>], iteration_bounds = array<i64: 1, 1>, scalar_prefetch = 0 : i64, scratch_operands = 3 : i64, tpu.core_type = #tpu.core_type<tc>, window_params = [{transform_indices = @transform_0, window_bounds = array<i64: 8, 8, 4>}, {pipeline_mode = #tpu.pipeline_mode<synchronous>, transform_indices = @transform_1, window_bounds = array<i64: 4, 512>}, {pipeline_mode = #tpu.pipeline_mode<synchronous>, transform_indices = @transform_2, window_bounds = array<i64: 128, 512>}, {pipeline_mode = #tpu.pipeline_mode<synchronous>, transform_indices = @transform_3, window_bounds = array<i64: 1, 512>}, {transform_indices = @transform_4, window_bounds = array<i64: 8, 128>}]} {
    %c0_i32 = arith.constant 0 : i32
    %0 = arith.cmpi eq, %arg1, %c0_i32 : i32
    %1 = arith.extui %0 : i1 to i32
    %c0_i32_0 = arith.constant 0 : i32
    %2 = arith.cmpi ne, %1, %c0_i32_0 : i32
    scf.if %2 {
      %cst_109 = arith.constant 0.000000e+00 : f32
      %275 = vector.broadcast %cst_109 : f32 to vector<8x128xf32>
      %c0_110 = arith.constant 0 : index
      %c0_111 = arith.constant 0 : index
      %276 = vector.load %arg8[%c0_110, %c0_111] : memref<8x128xf32, #tpu.memory_space<vmem>>, vector<8x128xf32>
      tpu.vector_store %arg8[%c0_110, %c0_111], %275 {strides = array<i32>} : memref<8x128xf32, #tpu.memory_space<vmem>>, vector<8x128xf32>,
      %cst_112 = arith.constant 0.000000e+00 : f32
      %277 = vector.broadcast %cst_112 : f32 to vector<8x128xf32>
      %c0_113 = arith.constant 0 : index
      %c0_114 = arith.constant 0 : index
      %278 = vector.load %arg9[%c0_113, %c0_114] : memref<8x128xf32, #tpu.memory_space<vmem>>, vector<8x128xf32>
      tpu.vector_store %arg9[%c0_113, %c0_114], %277 {strides = array<i32>} : memref<8x128xf32, #tpu.memory_space<vmem>>, vector<8x128xf32>,
    } else {
    }
    %c0 = arith.constant 0 : index
    %c0_1 = arith.constant 0 : index
    %c0_2 = arith.constant 0 : index
    %3 = vector.load %arg2[%c0, %c0_1, %c0_2] : memref<8x8x4xf32, #tpu.memory_space<vmem>>, vector<8x8x4xf32>
    %4 = vector.shape_cast %3 : vector<8x8x4xf32> to vector<64x4xf32>
    %c0_3 = arith.constant 0 : index
    %c0_4 = arith.constant 0 : index
    %5 = vector.load %arg3[%c0_3, %c0_4] : memref<4x512xf32, #tpu.memory_space<vmem>>, vector<4x512xf32>
    %cst = arith.constant dense<0.000000e+00> : vector<64x512xf32>
    %6 = tpu.matmul %4, %5, %cst {dimension_numbers = #tpu.dot_dimension_numbers<[1], [0], [0], [1], [0, 0, 1, 1], [], []>} : vector<64x4xf32>, vector<4x512xf32>, vector<64x512xf32> -> vector<64x512xf32>
    %c0_5 = arith.constant 0 : index
    %c0_6 = arith.constant 0 : index
    %7 = vector.load %arg5[%c0_5, %c0_6] : memref<1x512xf32, #tpu.memory_space<vmem>>, vector<1x512xf32>
    %8 = vector.broadcast %7 : vector<1x512xf32> to vector<64x512xf32>
    %9 = arith.addf %6, %8 : vector<64x512xf32>
    %10 = vector.shape_cast %9 : vector<64x512xf32> to vector<8x8x512xf32>
    %c0_7 = arith.constant 0 : index
    %c0_8 = arith.constant 0 : index
    %c0_9 = arith.constant 0 : index
    %11 = vector.load %arg7[%c0_7, %c0_8, %c0_9] : memref<8x8x512xf32, #tpu.memory_space<vmem>>, vector<8x8x512xf32>
    tpu.vector_store %arg7[%c0_7, %c0_8, %c0_9], %10 {strides = array<i32>} : memref<8x8x512xf32, #tpu.memory_space<vmem>>, vector<8x8x512xf32>,
    %c0_10 = arith.constant 0 : index
    %c0_11 = arith.constant 0 : index
    %12 = vector.load %arg8[%c0_10, %c0_11] : memref<8x128xf32, #tpu.memory_space<vmem>>, vector<8x128xf32>
    %c0_12 = arith.constant 0 : index
    %c0_13 = arith.constant 0 : index
    %13 = vector.load %arg9[%c0_12, %c0_13] : memref<8x128xf32, #tpu.memory_space<vmem>>, vector<8x128xf32>
    %c0_i32_14 = arith.constant 0 : i32
    %14 = arith.index_cast %c0_i32_14 : i32 to index
    %c0_15 = arith.constant 0 : index
    %c0_16 = arith.constant 0 : index
    %15 = vector.load %arg7[%14, %c0_15, %c0_16] : memref<8x8x512xf32, #tpu.memory_space<vmem>>, vector<1x8x512xf32>
    %16 = vector.shape_cast %15 : vector<1x8x512xf32> to vector<8x512xf32>
    %17 = arith.truncf %12 : vector<8x128xf32> to vector<8x128xbf16>
    %c0_17 = arith.constant 0 : index
    %c0_18 = arith.constant 0 : index
    %18 = vector.load %arg4[%c0_17, %c0_18] : memref<128x512xbf16, #tpu.memory_space<vmem>>, vector<128x512xbf16>
    %cst_19 = arith.constant dense<0.000000e+00> : vector<8x512xf32>
    %19 = tpu.matmul %17, %18, %cst_19 {dimension_numbers = #tpu.dot_dimension_numbers<[1], [0], [0], [1], [0, 0, 1, 1], [], []>} : vector<8x128xbf16>, vector<128x512xbf16>, vector<8x512xf32> -> vector<8x512xf32>
    %20 = arith.addf %16, %19 : vector<8x512xf32>
    %21 = vector.extract_strided_slice %20 {offsets = [0, 0], sizes = [8, 256], strides = [1, 1]} : vector<8x512xf32> to vector<8x256xf32>
    %cst_20 = arith.constant 5.000000e-01 : f32
    %22 = vector.broadcast %cst_20 : f32 to vector<8x256xf32>
    %23 = arith.mulf %22, %21 : vector<8x256xf32>
    %24 = math.tanh %23 : vector<8x256xf32>
    %cst_21 = arith.constant 5.000000e-01 : f32
    %25 = vector.broadcast %cst_21 : f32 to vector<8x256xf32>
    %26 = arith.mulf %25, %24 : vector<8x256xf32>
    %cst_22 = arith.constant 5.000000e-01 : f32
    %27 = vector.broadcast %cst_22 : f32 to vector<8x256xf32>
    %28 = arith.addf %26, %27 : vector<8x256xf32>
    %29 = vector.extract_strided_slice %28 {offsets = [0, 0], sizes = [8, 128], strides = [1, 1]} : vector<8x256xf32> to vector<8x128xf32>
    %30 = vector.extract_strided_slice %28 {offsets = [0, 128], sizes = [8, 128], strides = [1, 1]} : vector<8x256xf32> to vector<8x128xf32>
    %31 = vector.extract_strided_slice %20 {offsets = [0, 256], sizes = [8, 128], strides = [1, 1]} : vector<8x512xf32> to vector<8x128xf32>
    %32 = math.tanh %31 : vector<8x128xf32>
    %33 = vector.extract_strided_slice %20 {offsets = [0, 384], sizes = [8, 128], strides = [1, 1]} : vector<8x512xf32> to vector<8x128xf32>
    %cst_23 = arith.constant 5.000000e-01 : f32
    %34 = vector.broadcast %cst_23 : f32 to vector<8x128xf32>
    %35 = arith.mulf %34, %33 : vector<8x128xf32>
    %36 = math.tanh %35 : vector<8x128xf32>
    %cst_24 = arith.constant 5.000000e-01 : f32
    %37 = vector.broadcast %cst_24 : f32 to vector<8x128xf32>
    %38 = arith.mulf %37, %36 : vector<8x128xf32>
    %cst_25 = arith.constant 5.000000e-01 : f32
    %39 = vector.broadcast %cst_25 : f32 to vector<8x128xf32>
    %40 = arith.addf %38, %39 : vector<8x128xf32>
    %41 = arith.mulf %30, %13 : vector<8x128xf32>
    %42 = arith.mulf %29, %32 : vector<8x128xf32>
    %43 = arith.addf %41, %42 : vector<8x128xf32>
    %44 = math.tanh %43 : vector<8x128xf32>
    %45 = arith.mulf %40, %44 : vector<8x128xf32>
    %c1_i32 = arith.constant 1 : i32
    %46 = arith.index_cast %c1_i32 : i32 to index
    %c0_26 = arith.constant 0 : index
    %c0_27 = arith.constant 0 : index
    %47 = vector.load %arg7[%46, %c0_26, %c0_27] : memref<8x8x512xf32, #tpu.memory_space<vmem>>, vector<1x8x512xf32>
    %48 = vector.shape_cast %47 : vector<1x8x512xf32> to vector<8x512xf32>
    %49 = arith.truncf %45 : vector<8x128xf32> to vector<8x128xbf16>
    %c0_28 = arith.constant 0 : index
    %c0_29 = arith.constant 0 : index
    %50 = vector.load %arg4[%c0_28, %c0_29] : memref<128x512xbf16, #tpu.memory_space<vmem>>, vector<128x512xbf16>
    %cst_30 = arith.constant dense<0.000000e+00> : vector<8x512xf32>
    %51 = tpu.matmul %49, %50, %cst_30 {dimension_numbers = #tpu.dot_dimension_numbers<[1], [0], [0], [1], [0, 0, 1, 1], [], []>} : vector<8x128xbf16>, vector<128x512xbf16>, vector<8x512xf32> -> vector<8x512xf32>
    %52 = arith.addf %48, %51 : vector<8x512xf32>
    %53 = vector.extract_strided_slice %52 {offsets = [0, 0], sizes = [8, 256], strides = [1, 1]} : vector<8x512xf32> to vector<8x256xf32>
    %cst_31 = arith.constant 5.000000e-01 : f32
    %54 = vector.broadcast %cst_31 : f32 to vector<8x256xf32>
    %55 = arith.mulf %54, %53 : vector<8x256xf32>
    %56 = math.tanh %55 : vector<8x256xf32>
    %cst_32 = arith.constant 5.000000e-01 : f32
    %57 = vector.broadcast %cst_32 : f32 to vector<8x256xf32>
    %58 = arith.mulf %57, %56 : vector<8x256xf32>
    %cst_33 = arith.constant 5.000000e-01 : f32
    %59 = vector.broadcast %cst_33 : f32 to vector<8x256xf32>
    %60 = arith.addf %58, %59 : vector<8x256xf32>
    %61 = vector.extract_strided_slice %60 {offsets = [0, 0], sizes = [8, 128], strides = [1, 1]} : vector<8x256xf32> to vector<8x128xf32>
    %62 = vector.extract_strided_slice %60 {offsets = [0, 128], sizes = [8, 128], strides = [1, 1]} : vector<8x256xf32> to vector<8x128xf32>
    %63 = vector.extract_strided_slice %52 {offsets = [0, 256], sizes = [8, 128], strides = [1, 1]} : vector<8x512xf32> to vector<8x128xf32>
    %64 = math.tanh %63 : vector<8x128xf32>
    %65 = vector.extract_strided_slice %52 {offsets = [0, 384], sizes = [8, 128], strides = [1, 1]} : vector<8x512xf32> to vector<8x128xf32>
    %cst_34 = arith.constant 5.000000e-01 : f32
    %66 = vector.broadcast %cst_34 : f32 to vector<8x128xf32>
    %67 = arith.mulf %66, %65 : vector<8x128xf32>
    %68 = math.tanh %67 : vector<8x128xf32>
    %cst_35 = arith.constant 5.000000e-01 : f32
    %69 = vector.broadcast %cst_35 : f32 to vector<8x128xf32>
    %70 = arith.mulf %69, %68 : vector<8x128xf32>
    %cst_36 = arith.constant 5.000000e-01 : f32
    %71 = vector.broadcast %cst_36 : f32 to vector<8x128xf32>
    %72 = arith.addf %70, %71 : vector<8x128xf32>
    %73 = arith.mulf %62, %43 : vector<8x128xf32>
    %74 = arith.mulf %61, %64 : vector<8x128xf32>
    %75 = arith.addf %73, %74 : vector<8x128xf32>
    %76 = math.tanh %75 : vector<8x128xf32>
    %77 = arith.mulf %72, %76 : vector<8x128xf32>
    %c2_i32 = arith.constant 2 : i32
    %78 = arith.index_cast %c2_i32 : i32 to index
    %c0_37 = arith.constant 0 : index
    %c0_38 = arith.constant 0 : index
    %79 = vector.load %arg7[%78, %c0_37, %c0_38] : memref<8x8x512xf32, #tpu.memory_space<vmem>>, vector<1x8x512xf32>
    %80 = vector.shape_cast %79 : vector<1x8x512xf32> to vector<8x512xf32>
    %81 = arith.truncf %77 : vector<8x128xf32> to vector<8x128xbf16>
    %c0_39 = arith.constant 0 : index
    %c0_40 = arith.constant 0 : index
    %82 = vector.load %arg4[%c0_39, %c0_40] : memref<128x512xbf16, #tpu.memory_space<vmem>>, vector<128x512xbf16>
    %cst_41 = arith.constant dense<0.000000e+00> : vector<8x512xf32>
    %83 = tpu.matmul %81, %82, %cst_41 {dimension_numbers = #tpu.dot_dimension_numbers<[1], [0], [0], [1], [0, 0, 1, 1], [], []>} : vector<8x128xbf16>, vector<128x512xbf16>, vector<8x512xf32> -> vector<8x512xf32>
    %84 = arith.addf %80, %83 : vector<8x512xf32>
    %85 = vector.extract_strided_slice %84 {offsets = [0, 0], sizes = [8, 256], strides = [1, 1]} : vector<8x512xf32> to vector<8x256xf32>
    %cst_42 = arith.constant 5.000000e-01 : f32
    %86 = vector.broadcast %cst_42 : f32 to vector<8x256xf32>
    %87 = arith.mulf %86, %85 : vector<8x256xf32>
    %88 = math.tanh %87 : vector<8x256xf32>
    %cst_43 = arith.constant 5.000000e-01 : f32
    %89 = vector.broadcast %cst_43 : f32 to vector<8x256xf32>
    %90 = arith.mulf %89, %88 : vector<8x256xf32>
    %cst_44 = arith.constant 5.000000e-01 : f32
    %91 = vector.broadcast %cst_44 : f32 to vector<8x256xf32>
    %92 = arith.addf %90, %91 : vector<8x256xf32>
    %93 = vector.extract_strided_slice %92 {offsets = [0, 0], sizes = [8, 128], strides = [1, 1]} : vector<8x256xf32> to vector<8x128xf32>
    %94 = vector.extract_strided_slice %92 {offsets = [0, 128], sizes = [8, 128], strides = [1, 1]} : vector<8x256xf32> to vector<8x128xf32>
    %95 = vector.extract_strided_slice %84 {offsets = [0, 256], sizes = [8, 128], strides = [1, 1]} : vector<8x512xf32> to vector<8x128xf32>
    %96 = math.tanh %95 : vector<8x128xf32>
    %97 = vector.extract_strided_slice %84 {offsets = [0, 384], sizes = [8, 128], strides = [1, 1]} : vector<8x512xf32> to vector<8x128xf32>
    %cst_45 = arith.constant 5.000000e-01 : f32
    %98 = vector.broadcast %cst_45 : f32 to vector<8x128xf32>
    %99 = arith.mulf %98, %97 : vector<8x128xf32>
    %100 = math.tanh %99 : vector<8x128xf32>
    %cst_46 = arith.constant 5.000000e-01 : f32
    %101 = vector.broadcast %cst_46 : f32 to vector<8x128xf32>
    %102 = arith.mulf %101, %100 : vector<8x128xf32>
    %cst_47 = arith.constant 5.000000e-01 : f32
    %103 = vector.broadcast %cst_47 : f32 to vector<8x128xf32>
    %104 = arith.addf %102, %103 : vector<8x128xf32>
    %105 = arith.mulf %94, %75 : vector<8x128xf32>
    %106 = arith.mulf %93, %96 : vector<8x128xf32>
    %107 = arith.addf %105, %106 : vector<8x128xf32>
    %108 = math.tanh %107 : vector<8x128xf32>
    %109 = arith.mulf %104, %108 : vector<8x128xf32>
    %c3_i32 = arith.constant 3 : i32
    %110 = arith.index_cast %c3_i32 : i32 to index
    %c0_48 = arith.constant 0 : index
    %c0_49 = arith.constant 0 : index
    %111 = vector.load %arg7[%110, %c0_48, %c0_49] : memref<8x8x512xf32, #tpu.memory_space<vmem>>, vector<1x8x512xf32>
    %112 = vector.shape_cast %111 : vector<1x8x512xf32> to vector<8x512xf32>
    %113 = arith.truncf %109 : vector<8x128xf32> to vector<8x128xbf16>
    %c0_50 = arith.constant 0 : index
    %c0_51 = arith.constant 0 : index
    %114 = vector.load %arg4[%c0_50, %c0_51] : memref<128x512xbf16, #tpu.memory_space<vmem>>, vector<128x512xbf16>
    %cst_52 = arith.constant dense<0.000000e+00> : vector<8x512xf32>
    %115 = tpu.matmul %113, %114, %cst_52 {dimension_numbers = #tpu.dot_dimension_numbers<[1], [0], [0], [1], [0, 0, 1, 1], [], []>} : vector<8x128xbf16>, vector<128x512xbf16>, vector<8x512xf32> -> vector<8x512xf32>
    %116 = arith.addf %112, %115 : vector<8x512xf32>
    %117 = vector.extract_strided_slice %116 {offsets = [0, 0], sizes = [8, 256], strides = [1, 1]} : vector<8x512xf32> to vector<8x256xf32>
    %cst_53 = arith.constant 5.000000e-01 : f32
    %118 = vector.broadcast %cst_53 : f32 to vector<8x256xf32>
    %119 = arith.mulf %118, %117 : vector<8x256xf32>
    %120 = math.tanh %119 : vector<8x256xf32>
    %cst_54 = arith.constant 5.000000e-01 : f32
    %121 = vector.broadcast %cst_54 : f32 to vector<8x256xf32>
    %122 = arith.mulf %121, %120 : vector<8x256xf32>
    %cst_55 = arith.constant 5.000000e-01 : f32
    %123 = vector.broadcast %cst_55 : f32 to vector<8x256xf32>
    %124 = arith.addf %122, %123 : vector<8x256xf32>
    %125 = vector.extract_strided_slice %124 {offsets = [0, 0], sizes = [8, 128], strides = [1, 1]} : vector<8x256xf32> to vector<8x128xf32>
    %126 = vector.extract_strided_slice %124 {offsets = [0, 128], sizes = [8, 128], strides = [1, 1]} : vector<8x256xf32> to vector<8x128xf32>
    %127 = vector.extract_strided_slice %116 {offsets = [0, 256], sizes = [8, 128], strides = [1, 1]} : vector<8x512xf32> to vector<8x128xf32>
    %128 = math.tanh %127 : vector<8x128xf32>
    %129 = vector.extract_strided_slice %116 {offsets = [0, 384], sizes = [8, 128], strides = [1, 1]} : vector<8x512xf32> to vector<8x128xf32>
    %cst_56 = arith.constant 5.000000e-01 : f32
    %130 = vector.broadcast %cst_56 : f32 to vector<8x128xf32>
    %131 = arith.mulf %130, %129 : vector<8x128xf32>
    %132 = math.tanh %131 : vector<8x128xf32>
    %cst_57 = arith.constant 5.000000e-01 : f32
    %133 = vector.broadcast %cst_57 : f32 to vector<8x128xf32>
    %134 = arith.mulf %133, %132 : vector<8x128xf32>
    %cst_58 = arith.constant 5.000000e-01 : f32
    %135 = vector.broadcast %cst_58 : f32 to vector<8x128xf32>
    %136 = arith.addf %134, %135 : vector<8x128xf32>
    %137 = arith.mulf %126, %107 : vector<8x128xf32>
    %138 = arith.mulf %125, %128 : vector<8x128xf32>
    %139 = arith.addf %137, %138 : vector<8x128xf32>
    %140 = math.tanh %139 : vector<8x128xf32>
    %141 = arith.mulf %136, %140 : vector<8x128xf32>
    %c4_i32 = arith.constant 4 : i32
    %142 = arith.index_cast %c4_i32 : i32 to index
    %c0_59 = arith.constant 0 : index
    %c0_60 = arith.constant 0 : index
    %143 = vector.load %arg7[%142, %c0_59, %c0_60] : memref<8x8x512xf32, #tpu.memory_space<vmem>>, vector<1x8x512xf32>
    %144 = vector.shape_cast %143 : vector<1x8x512xf32> to vector<8x512xf32>
    %145 = arith.truncf %141 : vector<8x128xf32> to vector<8x128xbf16>
    %c0_61 = arith.constant 0 : index
    %c0_62 = arith.constant 0 : index
    %146 = vector.load %arg4[%c0_61, %c0_62] : memref<128x512xbf16, #tpu.memory_space<vmem>>, vector<128x512xbf16>
    %cst_63 = arith.constant dense<0.000000e+00> : vector<8x512xf32>
    %147 = tpu.matmul %145, %146, %cst_63 {dimension_numbers = #tpu.dot_dimension_numbers<[1], [0], [0], [1], [0, 0, 1, 1], [], []>} : vector<8x128xbf16>, vector<128x512xbf16>, vector<8x512xf32> -> vector<8x512xf32>
    %148 = arith.addf %144, %147 : vector<8x512xf32>
    %149 = vector.extract_strided_slice %148 {offsets = [0, 0], sizes = [8, 256], strides = [1, 1]} : vector<8x512xf32> to vector<8x256xf32>
    %cst_64 = arith.constant 5.000000e-01 : f32
    %150 = vector.broadcast %cst_64 : f32 to vector<8x256xf32>
    %151 = arith.mulf %150, %149 : vector<8x256xf32>
    %152 = math.tanh %151 : vector<8x256xf32>
    %cst_65 = arith.constant 5.000000e-01 : f32
    %153 = vector.broadcast %cst_65 : f32 to vector<8x256xf32>
    %154 = arith.mulf %153, %152 : vector<8x256xf32>
    %cst_66 = arith.constant 5.000000e-01 : f32
    %155 = vector.broadcast %cst_66 : f32 to vector<8x256xf32>
    %156 = arith.addf %154, %155 : vector<8x256xf32>
    %157 = vector.extract_strided_slice %156 {offsets = [0, 0], sizes = [8, 128], strides = [1, 1]} : vector<8x256xf32> to vector<8x128xf32>
    %158 = vector.extract_strided_slice %156 {offsets = [0, 128], sizes = [8, 128], strides = [1, 1]} : vector<8x256xf32> to vector<8x128xf32>
    %159 = vector.extract_strided_slice %148 {offsets = [0, 256], sizes = [8, 128], strides = [1, 1]} : vector<8x512xf32> to vector<8x128xf32>
    %160 = math.tanh %159 : vector<8x128xf32>
    %161 = vector.extract_strided_slice %148 {offsets = [0, 384], sizes = [8, 128], strides = [1, 1]} : vector<8x512xf32> to vector<8x128xf32>
    %cst_67 = arith.constant 5.000000e-01 : f32
    %162 = vector.broadcast %cst_67 : f32 to vector<8x128xf32>
    %163 = arith.mulf %162, %161 : vector<8x128xf32>
    %164 = math.tanh %163 : vector<8x128xf32>
    %cst_68 = arith.constant 5.000000e-01 : f32
    %165 = vector.broadcast %cst_68 : f32 to vector<8x128xf32>
    %166 = arith.mulf %165, %164 : vector<8x128xf32>
    %cst_69 = arith.constant 5.000000e-01 : f32
    %167 = vector.broadcast %cst_69 : f32 to vector<8x128xf32>
    %168 = arith.addf %166, %167 : vector<8x128xf32>
    %169 = arith.mulf %158, %139 : vector<8x128xf32>
    %170 = arith.mulf %157, %160 : vector<8x128xf32>
    %171 = arith.addf %169, %170 : vector<8x128xf32>
    %172 = math.tanh %171 : vector<8x128xf32>
    %173 = arith.mulf %168, %172 : vector<8x128xf32>
    %c5_i32 = arith.constant 5 : i32
    %174 = arith.index_cast %c5_i32 : i32 to index
    %c0_70 = arith.constant 0 : index
    %c0_71 = arith.constant 0 : index
    %175 = vector.load %arg7[%174, %c0_70, %c0_71] : memref<8x8x512xf32, #tpu.memory_space<vmem>>, vector<1x8x512xf32>
    %176 = vector.shape_cast %175 : vector<1x8x512xf32> to vector<8x512xf32>
    %177 = arith.truncf %173 : vector<8x128xf32> to vector<8x128xbf16>
    %c0_72 = arith.constant 0 : index
    %c0_73 = arith.constant 0 : index
    %178 = vector.load %arg4[%c0_72, %c0_73] : memref<128x512xbf16, #tpu.memory_space<vmem>>, vector<128x512xbf16>
    %cst_74 = arith.constant dense<0.000000e+00> : vector<8x512xf32>
    %179 = tpu.matmul %177, %178, %cst_74 {dimension_numbers = #tpu.dot_dimension_numbers<[1], [0], [0], [1], [0, 0, 1, 1], [], []>} : vector<8x128xbf16>, vector<128x512xbf16>, vector<8x512xf32> -> vector<8x512xf32>
    %180 = arith.addf %176, %179 : vector<8x512xf32>
    %181 = vector.extract_strided_slice %180 {offsets = [0, 0], sizes = [8, 256], strides = [1, 1]} : vector<8x512xf32> to vector<8x256xf32>
    %cst_75 = arith.constant 5.000000e-01 : f32
    %182 = vector.broadcast %cst_75 : f32 to vector<8x256xf32>
    %183 = arith.mulf %182, %181 : vector<8x256xf32>
    %184 = math.tanh %183 : vector<8x256xf32>
    %cst_76 = arith.constant 5.000000e-01 : f32
    %185 = vector.broadcast %cst_76 : f32 to vector<8x256xf32>
    %186 = arith.mulf %185, %184 : vector<8x256xf32>
    %cst_77 = arith.constant 5.000000e-01 : f32
    %187 = vector.broadcast %cst_77 : f32 to vector<8x256xf32>
    %188 = arith.addf %186, %187 : vector<8x256xf32>
    %189 = vector.extract_strided_slice %188 {offsets = [0, 0], sizes = [8, 128], strides = [1, 1]} : vector<8x256xf32> to vector<8x128xf32>
    %190 = vector.extract_strided_slice %188 {offsets = [0, 128], sizes = [8, 128], strides = [1, 1]} : vector<8x256xf32> to vector<8x128xf32>
    %191 = vector.extract_strided_slice %180 {offsets = [0, 256], sizes = [8, 128], strides = [1, 1]} : vector<8x512xf32> to vector<8x128xf32>
    %192 = math.tanh %191 : vector<8x128xf32>
    %193 = vector.extract_strided_slice %180 {offsets = [0, 384], sizes = [8, 128], strides = [1, 1]} : vector<8x512xf32> to vector<8x128xf32>
    %cst_78 = arith.constant 5.000000e-01 : f32
    %194 = vector.broadcast %cst_78 : f32 to vector<8x128xf32>
    %195 = arith.mulf %194, %193 : vector<8x128xf32>
    %196 = math.tanh %195 : vector<8x128xf32>
    %cst_79 = arith.constant 5.000000e-01 : f32
    %197 = vector.broadcast %cst_79 : f32 to vector<8x128xf32>
    %198 = arith.mulf %197, %196 : vector<8x128xf32>
    %cst_80 = arith.constant 5.000000e-01 : f32
    %199 = vector.broadcast %cst_80 : f32 to vector<8x128xf32>
    %200 = arith.addf %198, %199 : vector<8x128xf32>
    %201 = arith.mulf %190, %171 : vector<8x128xf32>
    %202 = arith.mulf %189, %192 : vector<8x128xf32>
    %203 = arith.addf %201, %202 : vector<8x128xf32>
    %204 = math.tanh %203 : vector<8x128xf32>
    %205 = arith.mulf %200, %204 : vector<8x128xf32>
    %c6_i32 = arith.constant 6 : i32
    %206 = arith.index_cast %c6_i32 : i32 to index
    %c0_81 = arith.constant 0 : index
    %c0_82 = arith.constant 0 : index
    %207 = vector.load %arg7[%206, %c0_81, %c0_82] : memref<8x8x512xf32, #tpu.memory_space<vmem>>, vector<1x8x512xf32>
    %208 = vector.shape_cast %207 : vector<1x8x512xf32> to vector<8x512xf32>
    %209 = arith.truncf %205 : vector<8x128xf32> to vector<8x128xbf16>
    %c0_83 = arith.constant 0 : index
    %c0_84 = arith.constant 0 : index
    %210 = vector.load %arg4[%c0_83, %c0_84] : memref<128x512xbf16, #tpu.memory_space<vmem>>, vector<128x512xbf16>
    %cst_85 = arith.constant dense<0.000000e+00> : vector<8x512xf32>
    %211 = tpu.matmul %209, %210, %cst_85 {dimension_numbers = #tpu.dot_dimension_numbers<[1], [0], [0], [1], [0, 0, 1, 1], [], []>} : vector<8x128xbf16>, vector<128x512xbf16>, vector<8x512xf32> -> vector<8x512xf32>
    %212 = arith.addf %208, %211 : vector<8x512xf32>
    %213 = vector.extract_strided_slice %212 {offsets = [0, 0], sizes = [8, 256], strides = [1, 1]} : vector<8x512xf32> to vector<8x256xf32>
    %cst_86 = arith.constant 5.000000e-01 : f32
    %214 = vector.broadcast %cst_86 : f32 to vector<8x256xf32>
    %215 = arith.mulf %214, %213 : vector<8x256xf32>
    %216 = math.tanh %215 : vector<8x256xf32>
    %cst_87 = arith.constant 5.000000e-01 : f32
    %217 = vector.broadcast %cst_87 : f32 to vector<8x256xf32>
    %218 = arith.mulf %217, %216 : vector<8x256xf32>
    %cst_88 = arith.constant 5.000000e-01 : f32
    %219 = vector.broadcast %cst_88 : f32 to vector<8x256xf32>
    %220 = arith.addf %218, %219 : vector<8x256xf32>
    %221 = vector.extract_strided_slice %220 {offsets = [0, 0], sizes = [8, 128], strides = [1, 1]} : vector<8x256xf32> to vector<8x128xf32>
    %222 = vector.extract_strided_slice %220 {offsets = [0, 128], sizes = [8, 128], strides = [1, 1]} : vector<8x256xf32> to vector<8x128xf32>
    %223 = vector.extract_strided_slice %212 {offsets = [0, 256], sizes = [8, 128], strides = [1, 1]} : vector<8x512xf32> to vector<8x128xf32>
    %224 = math.tanh %223 : vector<8x128xf32>
    %225 = vector.extract_strided_slice %212 {offsets = [0, 384], sizes = [8, 128], strides = [1, 1]} : vector<8x512xf32> to vector<8x128xf32>
    %cst_89 = arith.constant 5.000000e-01 : f32
    %226 = vector.broadcast %cst_89 : f32 to vector<8x128xf32>
    %227 = arith.mulf %226, %225 : vector<8x128xf32>
    %228 = math.tanh %227 : vector<8x128xf32>
    %cst_90 = arith.constant 5.000000e-01 : f32
    %229 = vector.broadcast %cst_90 : f32 to vector<8x128xf32>
    %230 = arith.mulf %229, %228 : vector<8x128xf32>
    %cst_91 = arith.constant 5.000000e-01 : f32
    %231 = vector.broadcast %cst_91 : f32 to vector<8x128xf32>
    %232 = arith.addf %230, %231 : vector<8x128xf32>
    %233 = arith.mulf %222, %203 : vector<8x128xf32>
    %234 = arith.mulf %221, %224 : vector<8x128xf32>
    %235 = arith.addf %233, %234 : vector<8x128xf32>
    %236 = math.tanh %235 : vector<8x128xf32>
    %237 = arith.mulf %232, %236 : vector<8x128xf32>
    %c7_i32 = arith.constant 7 : i32
    %238 = arith.index_cast %c7_i32 : i32 to index
    %c0_92 = arith.constant 0 : index
    %c0_93 = arith.constant 0 : index
    %239 = vector.load %arg7[%238, %c0_92, %c0_93] : memref<8x8x512xf32, #tpu.memory_space<vmem>>, vector<1x8x512xf32>
    %240 = vector.shape_cast %239 : vector<1x8x512xf32> to vector<8x512xf32>
    %241 = arith.truncf %237 : vector<8x128xf32> to vector<8x128xbf16>
    %c0_94 = arith.constant 0 : index
    %c0_95 = arith.constant 0 : index
    %242 = vector.load %arg4[%c0_94, %c0_95] : memref<128x512xbf16, #tpu.memory_space<vmem>>, vector<128x512xbf16>
    %cst_96 = arith.constant dense<0.000000e+00> : vector<8x512xf32>
    %243 = tpu.matmul %241, %242, %cst_96 {dimension_numbers = #tpu.dot_dimension_numbers<[1], [0], [0], [1], [0, 0, 1, 1], [], []>} : vector<8x128xbf16>, vector<128x512xbf16>, vector<8x512xf32> -> vector<8x512xf32>
    %244 = arith.addf %240, %243 : vector<8x512xf32>
    %245 = vector.extract_strided_slice %244 {offsets = [0, 0], sizes = [8, 256], strides = [1, 1]} : vector<8x512xf32> to vector<8x256xf32>
    %cst_97 = arith.constant 5.000000e-01 : f32
    %246 = vector.broadcast %cst_97 : f32 to vector<8x256xf32>
    %247 = arith.mulf %246, %245 : vector<8x256xf32>
    %248 = math.tanh %247 : vector<8x256xf32>
    %cst_98 = arith.constant 5.000000e-01 : f32
    %249 = vector.broadcast %cst_98 : f32 to vector<8x256xf32>
    %250 = arith.mulf %249, %248 : vector<8x256xf32>
    %cst_99 = arith.constant 5.000000e-01 : f32
    %251 = vector.broadcast %cst_99 : f32 to vector<8x256xf32>
    %252 = arith.addf %250, %251 : vector<8x256xf32>
    %253 = vector.extract_strided_slice %252 {offsets = [0, 0], sizes = [8, 128], strides = [1, 1]} : vector<8x256xf32> to vector<8x128xf32>
    %254 = vector.extract_strided_slice %252 {offsets = [0, 128], sizes = [8, 128], strides = [1, 1]} : vector<8x256xf32> to vector<8x128xf32>
    %255 = vector.extract_strided_slice %244 {offsets = [0, 256], sizes = [8, 128], strides = [1, 1]} : vector<8x512xf32> to vector<8x128xf32>
    %256 = math.tanh %255 : vector<8x128xf32>
    %257 = vector.extract_strided_slice %244 {offsets = [0, 384], sizes = [8, 128], strides = [1, 1]} : vector<8x512xf32> to vector<8x128xf32>
    %cst_100 = arith.constant 5.000000e-01 : f32
    %258 = vector.broadcast %cst_100 : f32 to vector<8x128xf32>
    %259 = arith.mulf %258, %257 : vector<8x128xf32>
    %260 = math.tanh %259 : vector<8x128xf32>
    %cst_101 = arith.constant 5.000000e-01 : f32
    %261 = vector.broadcast %cst_101 : f32 to vector<8x128xf32>
    %262 = arith.mulf %261, %260 : vector<8x128xf32>
    %cst_102 = arith.constant 5.000000e-01 : f32
    %263 = vector.broadcast %cst_102 : f32 to vector<8x128xf32>
    %264 = arith.addf %262, %263 : vector<8x128xf32>
    %265 = arith.mulf %254, %235 : vector<8x128xf32>
    %266 = arith.mulf %253, %256 : vector<8x128xf32>
    %267 = arith.addf %265, %266 : vector<8x128xf32>
    %268 = math.tanh %267 : vector<8x128xf32>
    %269 = arith.mulf %264, %268 : vector<8x128xf32>
    %c8_i32 = arith.constant 8 : i32
    %c0_103 = arith.constant 0 : index
    %c0_104 = arith.constant 0 : index
    %270 = vector.load %arg8[%c0_103, %c0_104] : memref<8x128xf32, #tpu.memory_space<vmem>>, vector<8x128xf32>
    tpu.vector_store %arg8[%c0_103, %c0_104], %269 {strides = array<i32>} : memref<8x128xf32, #tpu.memory_space<vmem>>, vector<8x128xf32>,
    %c0_105 = arith.constant 0 : index
    %c0_106 = arith.constant 0 : index
    %271 = vector.load %arg9[%c0_105, %c0_106] : memref<8x128xf32, #tpu.memory_space<vmem>>, vector<8x128xf32>
    tpu.vector_store %arg9[%c0_105, %c0_106], %267 {strides = array<i32>} : memref<8x128xf32, #tpu.memory_space<vmem>>, vector<8x128xf32>,
    %c0_i32_107 = arith.constant 0 : i32
    %272 = arith.cmpi eq, %arg1, %c0_i32_107 : i32
    %273 = arith.extui %272 : i1 to i32
    %c0_i32_108 = arith.constant 0 : i32
    %274 = arith.cmpi ne, %273, %c0_i32_108 : i32
    scf.if %274 {
      %c0_109 = arith.constant 0 : index
      %c0_110 = arith.constant 0 : index
      %275 = vector.load %arg8[%c0_109, %c0_110] : memref<8x128xf32, #tpu.memory_space<vmem>>, vector<8x128xf32>
      %c0_111 = arith.constant 0 : index
      %c0_112 = arith.constant 0 : index
      %276 = vector.load %arg6[%c0_111, %c0_112] : memref<8x128xf32, #tpu.memory_space<vmem>>, vector<8x128xf32>
      tpu.vector_store %arg6[%c0_111, %c0_112], %275 {strides = array<i32>} : memref<8x128xf32, #tpu.memory_space<vmem>>, vector<8x128xf32>,
    } else {
    }
    return
  }
  func.func @transform_0(%arg0: i32, %arg1: i32) -> (i32, i32, i32) {
    %c0_i32 = arith.constant 0 : i32
    %c0_i32_0 = arith.constant 0 : i32
    return %arg1, %arg0, %c0_i32 : i32, i32, i32
  }
  func.func @transform_1(%arg0: i32, %arg1: i32) -> (i32, i32) {
    %c0_i32 = arith.constant 0 : i32
    %c0_i32_0 = arith.constant 0 : i32
    %c0_i32_1 = arith.constant 0 : i32
    return %c0_i32, %c0_i32_0 : i32, i32
  }
  func.func @transform_2(%arg0: i32, %arg1: i32) -> (i32, i32) {
    %c0_i32 = arith.constant 0 : i32
    %c0_i32_0 = arith.constant 0 : i32
    %c0_i32_1 = arith.constant 0 : i32
    return %c0_i32, %c0_i32_0 : i32, i32
  }
  func.func @transform_3(%arg0: i32, %arg1: i32) -> (i32, i32) {
    %c0_i32 = arith.constant 0 : i32
    %c0_i32_0 = arith.constant 0 : i32
    %c0_i32_1 = arith.constant 0 : i32
    return %c0_i32, %c0_i32_0 : i32, i32
  }
  func.func @transform_4(%arg0: i32, %arg1: i32) -> (i32, i32) {
    %c0_i32 = arith.constant 0 : i32
    %c0_i32_0 = arith.constant 0 : i32
    return %arg0, %c0_i32 : i32, i32
  }
}

</mosaic_0001>

<llo_original>
// kernel: com_lstm_forward.1
$region0: #{com_lstm_forward.1}
  #allocation0 [shape = 'u32[]', space=smem, size = 0x4, offset = 0x4, fixed_abs, tag = 'smem constant byte address 0x4 - core index']
  #allocation1 [shape = 'u32[144,128]{1,0:T(1,128)}', space=vmem, size = 0x12000, scoped, tag = 'internal scratch']
  #allocation2 [shape = 'f32[8,8,512]{2,1,0:T(8,128)}', space=vmem, size = 0x20000, scoped, tag = 'scratch operand']
  #allocation3 [shape = 'f32[8,128]{1,0:T(8,128)}', space=vmem, size = 0x1000, scoped, tag = 'scratch operand']
  #allocation4 [shape = 'f32[8,128]{1,0:T(8,128)}', space=vmem, size = 0x1000, scoped, tag = 'scratch operand']
  %s0 = inlined_call_operand.vmem [shape: f32[8,8,4], index: 0, kind: input, shape index: {}]
  %s1 = inlined_call_operand.vmem [shape: f32[4,512], index: 1, kind: input, shape index: {}]
  %s2 = inlined_call_operand.vmem [shape: bf16[128,512], index: 2, kind: input, shape index: {}]
  %s3 = inlined_call_operand.vmem [shape: f32[1,512], index: 3, kind: input, shape index: {}]
  %s4 = inlined_call_operand.vmem [shape: f32[8,128], index: 4, kind: output, shape index: {}]
  %s5 = sld [smem:[#allocation0]]
  $region34: #{com_lstm_forward.1} parent=0
    _
  %s7 = ssub.s32 1, %s5
  %s8 = scalar_select 0, %s7, %s5
  // Predicated region
  $region2: #{com_lstm_forward.1} parent=0 // pred_check
    _
  $region3: #{com_lstm_forward.1} parent=0 // pred_check_branch
    %10 = sbr.rel (0) target = $region5
  $region4: #{com_lstm_forward.1} parent=0 // pred_region
    _
  $region5: #{com_lstm_forward.1} parent=0 // pred_fallthru
    _
  // Predicated region
  $region6: #{com_lstm_forward.1} parent=0 // pred_check
    _
  $region7: #{com_lstm_forward.1} parent=0 // pred_check_branch
    %12 = sbr.rel (0) target = $region9
  $region8: #{com_lstm_forward.1} parent=0 // pred_region
    _
  $region9: #{com_lstm_forward.1} parent=0 // pred_fallthru
    _
  // Predicated region
  $region10: #{com_lstm_forward.1} parent=0 // pred_check
    _
  $region11: #{com_lstm_forward.1} parent=0 // pred_check_branch
    %14 = sbr.rel (0) target = $region13
  $region12: #{com_lstm_forward.1} parent=0 // pred_region
    _
  $region13: #{com_lstm_forward.1} parent=0 // pred_fallthru
    _
  // Predicated region
  $region14: #{com_lstm_forward.1} parent=0 // pred_check
    _
  $region15: #{com_lstm_forward.1} parent=0 // pred_check_branch
    %16 = sbr.rel (0) target = $region17
  $region16: #{com_lstm_forward.1} parent=0 // pred_region
    _
  $region17: #{com_lstm_forward.1} parent=0 // pred_fallthru
    _
  %p18 = scmp.eq.s32.totalorder 0, 0
  // Predicated region
  $region18: #{com_lstm_forward.1} parent=0 // pred_check
    %p19 = pneg %p18
  $region19: #{com_lstm_forward.1} parent=0 // pred_check_branch
    %21 = sbr.rel (%p19) target = $region21
  $region20: #{com_lstm_forward.1} parent=0 // pred_region
    %22 = vst [vmem:[#allocation3] sm:$0xff] 0.0
    %23 = vst [vmem:[#allocation4] sm:$0xff] 0.0
  $region21: #{com_lstm_forward.1} parent=0 // pred_fallthru
    _
  %v24 = vld [vmem:[%s0] sm:$0xff]
  %v25 = vld [vmem:[%s0 + $0x8] sm:$0xff]
  %v26 = vld [vmem:[%s0 + $0x10] sm:$0xff]
  %v27 = vld [vmem:[%s0 + $0x18] sm:$0xff]
  %v28 = vld [vmem:[%s0 + $0x20] sm:$0xff]
  %v29 = vld [vmem:[%s0 + $0x28] sm:$0xff]
  %v30 = vld [vmem:[%s0 + $0x30] sm:$0xff]
  %v31 = vld [vmem:[%s0 + $0x38] sm:$0xff]
  %v32 = vld [vmem:[%s1] sm:$0xff]
  %v33 = vld [vmem:[%s1 + $0x8] sm:$0xff]
  %v34 = vld [vmem:[%s3] sm:$0xf]
  %v36 = vlaneseq
  %v37 = vshrl.u32 %v36, 7
  %v38 = vsub.s32 0, %v37
  %v39 = vrot.slane %v34, %v38
  %v40 = vlaneseq
  %v41 = vshrl.u32 %v40, 7
  %v42 = vsub.s32 1, %v41
  %v43 = vrot.slane %v34, %v42
  %v44 = vlaneseq
  %v45 = vshrl.u32 %v44, 7
  %v46 = vsub.s32 2, %v45
  %v47 = vrot.slane %v34, %v46
  %v48 = vlaneseq
  %v49 = vshrl.u32 %v48, 7
  %v50 = vsub.s32 3, %v49
  %v51 = vrot.slane %v34, %v50
  %v58 = vcombine.high %v32, %v32
  %v59 = vcombine.high %v33, %v33
  %vm60 = vcmask 31744
  %v62 = vsel %vm60, %v24, 0
  %v65 = vsel %vm60, %v25, 0
  %v68 = vsel %vm60, %v26, 0
  %v71 = vsel %vm60, %v27, 0
  %v74 = vsel %vm60, %v28, 0
  %v77 = vsel %vm60, %v29, 0
  %v80 = vsel %vm60, %v30, 0
  %v83 = vsel %vm60, %v31, 0
  %vm85 = vcmask 1043456
  %v86 = vsel %vm85, %v32, 0
  %v88 = vsel %vm85, %v58, 0
  %v90 = vsel %vm85, %v33, 0
  %v92 = vsel %vm85, %v59, 0
  %94 = vmatprep.subr.mxu0 0.0
  %95 = vmatpush1.msra.mxu0 0.0
  %96 = vmatprep.subr.mxu0 0.0
  %97 = vmatpush1.msra.mxu0 0.0
  %98 = vmatprep.subr.mxu0 0.0
  %99 = vmatpush1.msra.mxu0 0.0
  %100 = vmatprep.subr.mxu0 0.0
  %101 = vmatpush1.msra.mxu0 0.0
  %102 = vmatprep.subr.mxu0 0.0
  %103 = vmatpush1.msra.mxu0 0.0
  %104 = vmatprep.subr.mxu0 0.0
  %105 = vmatpush1.msra.mxu0 0.0
  %106 = vmatprep.subr.mxu0 0.0
  %107 = vmatpush1.msra.mxu0 0.0
  %108 = vmatprep.subr.mxu0 0.0
  %109 = vmatpush1.msra.mxu0 0.0
  %110 = vmatprep.subr.mxu0 0.0
  %111 = vmatpush1.msra.mxu0 0.0
  %112 = vmatprep.subr.mxu0 0.0
  %113 = vmatpush1.msra.mxu0 0.0
  %114 = vmatprep.subr.mxu0 0.0
  %115 = vmatpush1.msra.mxu0 0.0
  %116 = vmatprep.subr.mxu0 0.0
  %117 = vmatpush1.msra.mxu0 0.0
  %118 = vmatprep.subr.mxu0 0.0
  %119 = vmatpush1.msra.mxu0 0.0
  %120 = vmatprep.subr.mxu0 0.0
  %121 = vmatpush1.msra.mxu0 0.0
  %122 = vmatprep.subr.mxu0 0.0
  %123 = vmatpush1.msra.mxu0 0.0
  %124 = vmatprep.subr.mxu0 %v88
  %125 = vmatpush1.msra.mxu0 %v86
  %126 = vmatprep.subr.mxu0 0.0
  %127 = vmatpush2.msra.mxu0 0.0
  %128 = vmatprep.subr.mxu0 0.0
  %129 = vmatpush2.msra.mxu0 0.0
  %130 = vmatprep.subr.mxu0 0.0
  %131 = vmatpush2.msra.mxu0 0.0
  %132 = vmatprep.subr.mxu0 0.0
  %133 = vmatpush2.msra.mxu0 0.0
  %134 = vmatprep.subr.mxu0 0.0
  %135 = vmatpush2.msra.mxu0 0.0
  %136 = vmatprep.subr.mxu0 0.0
  %137 = vmatpush2.msra.mxu0 0.0
  %138 = vmatprep.subr.mxu0 0.0
  %139 = vmatpush2.msra.mxu0 0.0
  %140 = vmatprep.subr.mxu0 0.0
  %141 = vmatpush2.msra.mxu0 0.0
  %142 = vmatprep.subr.mxu0 0.0
  %143 = vmatpush2.msra.mxu0 0.0
  %144 = vmatprep.subr.mxu0 0.0
  %145 = vmatpush2.msra.mxu0 0.0
  %146 = vmatprep.subr.mxu0 0.0
  %147 = vmatpush2.msra.mxu0 0.0
  %148 = vmatprep.subr.mxu0 0.0
  %149 = vmatpush2.msra.mxu0 0.0
  %150 = vmatprep.subr.mxu0 0.0
  %151 = vmatpush2.msra.mxu0 0.0
  %152 = vmatprep.subr.mxu0 0.0
  %153 = vmatpush2.msra.mxu0 0.0
  %154 = vmatprep.subr.mxu0 0.0
  %155 = vmatpush2.msra.mxu0 0.0
  %156 = vmatprep.subr.mxu0 0.0
  %157 = vmatpush2.msra.mxu0 0.0
  %158 = vmatprep.mubr.f32.mxu0 0.0
  %159 = vmatmul.mubr.f32.gmra.mxu0 %v62
  %v160 = vpop.f32.mrf.mxu0
  %v161 = vadd.f32 %v39, %v160
  %v162 = vpop.f32.mrf.mxu0
  %v163 = vadd.f32 %v43, %v162
  %164 = vmatprep.mubr.f32.mxu0 0.0
  %165 = vmatmul.mubr.f32.gmra.mxu0 %v65
  %v166 = vpop.f32.mrf.mxu0
  %v167 = vadd.f32 %v39, %v166
  %v168 = vpop.f32.mrf.mxu0
  %v169 = vadd.f32 %v43, %v168
  %170 = vmatprep.mubr.f32.mxu0 0.0
  %171 = vmatmul.mubr.f32.gmra.mxu0 %v68
  %v172 = vpop.f32.mrf.mxu0
  %v173 = vadd.f32 %v39, %v172
  %v174 = vpop.f32.mrf.mxu0
  %v175 = vadd.f32 %v43, %v174
  %176 = vmatprep.mubr.f32.mxu0 0.0
  %177 = vmatmul.mubr.f32.gmra.mxu0 %v71
  %v178 = vpop.f32.mrf.mxu0
  %v179 = vadd.f32 %v39, %v178
  %v180 = vpop.f32.mrf.mxu0
  %v181 = vadd.f32 %v43, %v180
  %182 = vmatprep.mubr.f32.mxu0 0.0
  %183 = vmatmul.mubr.f32.gmra.mxu0 %v74
  %v184 = vpop.f32.mrf.mxu0
  %v185 = vadd.f32 %v39, %v184
  %v186 = vpop.f32.mrf.mxu0
  %v187 = vadd.f32 %v43, %v186
  %188 = vmatprep.mubr.f32.mxu0 0.0
  %189 = vmatmul.mubr.f32.gmra.mxu0 %v77
  %v190 = vpop.f32.mrf.mxu0
  %v191 = vadd.f32 %v39, %v190
  %v192 = vpop.f32.mrf.mxu0
  %v193 = vadd.f32 %v43, %v192
  %194 = vmatprep.mubr.f32.mxu0 0.0
  %195 = vmatmul.mubr.f32.gmra.mxu0 %v80
  %v196 = vpop.f32.mrf.mxu0
  %v197 = vadd.f32 %v39, %v196
  %v198 = vpop.f32.mrf.mxu0
  %v199 = vadd.f32 %v43, %v198
  %200 = vmatprep.mubr.f32.mxu0 0.0
  %201 = vmatmul.mubr.f32.gmra.mxu0 %v83
  %v202 = vpop.f32.mrf.mxu0
  %v203 = vadd.f32 %v39, %v202
  %v204 = vpop.f32.mrf.mxu0
  %v205 = vadd.f32 %v43, %v204
  %206 = vdwg.mxu0
  %207 = vmatprep.subr.mxu0 0.0
  %208 = vmatpush1.msra.mxu0 0.0
  %209 = vmatprep.subr.mxu0 0.0
  %210 = vmatpush1.msra.mxu0 0.0
  %211 = vmatprep.subr.mxu0 0.0
  %212 = vmatpush1.msra.mxu0 0.0
  %213 = vmatprep.subr.mxu0 0.0
  %214 = vmatpush1.msra.mxu0 0.0
  %215 = vmatprep.subr.mxu0 0.0
  %216 = vmatpush1.msra.mxu0 0.0
  %217 = vmatprep.subr.mxu0 0.0
  %218 = vmatpush1.msra.mxu0 0.0
  %219 = vmatprep.subr.mxu0 0.0
  %220 = vmatpush1.msra.mxu0 0.0
  %221 = vmatprep.subr.mxu0 0.0
  %222 = vmatpush1.msra.mxu0 0.0
  %223 = vmatprep.subr.mxu0 0.0
  %224 = vmatpush1.msra.mxu0 0.0
  %225 = vmatprep.subr.mxu0 0.0
  %226 = vmatpush1.msra.mxu0 0.0
  %227 = vmatprep.subr.mxu0 0.0
  %228 = vmatpush1.msra.mxu0 0.0
  %229 = vmatprep.subr.mxu0 0.0
  %230 = vmatpush1.msra.mxu0 0.0
  %231 = vmatprep.subr.mxu0 0.0
  %232 = vmatpush1.msra.mxu0 0.0
  %233 = vmatprep.subr.mxu0 0.0
  %234 = vmatpush1.msra.mxu0 0.0
  %235 = vmatprep.subr.mxu0 0.0
  %236 = vmatpush1.msra.mxu0 0.0
  %237 = vmatprep.subr.mxu0 %v92
  %238 = vmatpush1.msra.mxu0 %v90
  %239 = vmatprep.subr.mxu0 0.0
  %240 = vmatpush2.msra.mxu0 0.0
  %241 = vmatprep.subr.mxu0 0.0
  %242 = vmatpush2.msra.mxu0 0.0
  %243 = vmatprep.subr.mxu0 0.0
  %244 = vmatpush2.msra.mxu0 0.0
  %245 = vmatprep.subr.mxu0 0.0
  %246 = vmatpush2.msra.mxu0 0.0
  %247 = vmatprep.subr.mxu0 0.0
  %248 = vmatpush2.msra.mxu0 0.0
  %249 = vmatprep.subr.mxu0 0.0
  %250 = vmatpush2.msra.mxu0 0.0
  %251 = vmatprep.subr.mxu0 0.0
  %252 = vmatpush2.msra.mxu0 0.0
  %253 = vmatprep.subr.mxu0 0.0
  %254 = vmatpush2.msra.mxu0 0.0
  %255 = vmatprep.subr.mxu0 0.0
  %256 = vmatpush2.msra.mxu0 0.0
  %257 = vmatprep.subr.mxu0 0.0
  %258 = vmatpush2.msra.mxu0 0.0
  %259 = vmatprep.subr.mxu0 0.0
  %260 = vmatpush2.msra.mxu0 0.0
  %261 = vmatprep.subr.mxu0 0.0
  %262 = vmatpush2.msra.mxu0 0.0
  %263 = vmatprep.subr.mxu0 0.0
  %264 = vmatpush2.msra.mxu0 0.0
  %265 = vmatprep.subr.mxu0 0.0
  %266 = vmatpush2.msra.mxu0 0.0
  %267 = vmatprep.subr.mxu0 0.0
  %268 = vmatpush2.msra.mxu0 0.0
  %269 = vmatprep.subr.mxu0 0.0
  %270 = vmatpush2.msra.mxu0 0.0
  %271 = vmatprep.mubr.f32.mxu0 0.0
  %272 = vmatmul.mubr.f32.gmra.mxu0 %v62
  %v273 = vpop.f32.mrf.mxu0
  %v274 = vadd.f32 %v47, %v273
  %v275 = vpop.f32.mrf.mxu0
  %v276 = vadd.f32 %v51, %v275
  %277 = vmatprep.mubr.f32.mxu0 0.0
  %278 = vmatmul.mubr.f32.gmra.mxu0 %v65
  %v279 = vpop.f32.mrf.mxu0
  %v280 = vadd.f32 %v47, %v279
  %v281 = vpop.f32.mrf.mxu0
  %v282 = vadd.f32 %v51, %v281
  %283 = vmatprep.mubr.f32.mxu0 0.0
  %284 = vmatmul.mubr.f32.gmra.mxu0 %v68
  %v285 = vpop.f32.mrf.mxu0
  %v286 = vadd.f32 %v47, %v285
  %v287 = vpop.f32.mrf.mxu0
  %v288 = vadd.f32 %v51, %v287
  %289 = vmatprep.mubr.f32.mxu0 0.0
  %290 = vmatmul.mubr.f32.gmra.mxu0 %v71
  %v291 = vpop.f32.mrf.mxu0
  %v292 = vadd.f32 %v47, %v291
  %v293 = vpop.f32.mrf.mxu0
  %v294 = vadd.f32 %v51, %v293
  %295 = vmatprep.mubr.f32.mxu0 0.0
  %296 = vmatmul.mubr.f32.gmra.mxu0 %v74
  %v297 = vpop.f32.mrf.mxu0
  %v298 = vadd.f32 %v47, %v297
  %v299 = vpop.f32.mrf.mxu0
  %v300 = vadd.f32 %v51, %v299
  %301 = vmatprep.mubr.f32.mxu0 0.0
  %302 = vmatmul.mubr.f32.gmra.mxu0 %v77
  %v303 = vpop.f32.mrf.mxu0
  %v304 = vadd.f32 %v47, %v303
  %v305 = vpop.f32.mrf.mxu0
  %v306 = vadd.f32 %v51, %v305
  %307 = vmatprep.mubr.f32.mxu0 0.0
  %308 = vmatmul.mubr.f32.gmra.mxu0 %v80
  %v309 = vpop.f32.mrf.mxu0
  %v310 = vadd.f32 %v47, %v309
  %v311 = vpop.f32.mrf.mxu0
  %v312 = vadd.f32 %v51, %v311
  %313 = vmatprep.mubr.f32.mxu0 0.0
  %314 = vmatmul.mubr.f32.gmra.mxu0 %v83
  %v315 = vpop.f32.mrf.mxu0
  %v316 = vadd.f32 %v47, %v315
  %v317 = vpop.f32.mrf.mxu0
  %v318 = vadd.f32 %v51, %v317
  %319 = vdwg.mxu0
  %320 = vst [vmem:[#allocation2] sm:$0xff] %v161
  %321 = vst [vmem:[#allocation2 + $0x8] sm:$0xff] %v163
  %322 = vst [vmem:[#allocation2 + $0x10] sm:$0xff] %v274
  %323 = vst [vmem:[#allocation2 + $0x18] sm:$0xff] %v276
  %324 = vst [vmem:[#allocation2 + $0x20] sm:$0xff] %v167
  %325 = vst [vmem:[#allocation2 + $0x28] sm:$0xff] %v169
  %326 = vst [vmem:[#allocation2 + $0x30] sm:$0xff] %v280
  %327 = vst [vmem:[#allocation2 + $0x38] sm:$0xff] %v282
  %328 = vst [vmem:[#allocation2 + $0x40] sm:$0xff] %v173
  %329 = vst [vmem:[#allocation2 + $0x48] sm:$0xff] %v175
  %330 = vst [vmem:[#allocation2 + $0x50] sm:$0xff] %v286
  %331 = vst [vmem:[#allocation2 + $0x58] sm:$0xff] %v288
  %332 = vst [vmem:[#allocation2 + $0x60] sm:$0xff] %v179
  %333 = vst [vmem:[#allocation2 + $0x68] sm:$0xff] %v181
  %334 = vst [vmem:[#allocation2 + $0x70] sm:$0xff] %v292
  %335 = vst [vmem:[#allocation2 + $0x78] sm:$0xff] %v294
  %336 = vst [vmem:[#allocation2 + $0x80] sm:$0xff] %v185
  %337 = vst [vmem:[#allocation2 + $0x88] sm:$0xff] %v187
  %338 = vst [vmem:[#allocation2 + $0x90] sm:$0xff] %v298
  %339 = vst [vmem:[#allocation2 + $0x98] sm:$0xff] %v300
  %340 = vst [vmem:[#allocation2 + $0xa0] sm:$0xff] %v191
  %341 = vst [vmem:[#allocation2 + $0xa8] sm:$0xff] %v193
  %342 = vst [vmem:[#allocation2 + $0xb0] sm:$0xff] %v304
  %343 = vst [vmem:[#allocation2 + $0xb8] sm:$0xff] %v306
  %344 = vst [vmem:[#allocation2 + $0xc0] sm:$0xff] %v197
  %345 = vst [vmem:[#allocation2 + $0xc8] sm:$0xff] %v199
  %346 = vst [vmem:[#allocation2 + $0xd0] sm:$0xff] %v310
  %347 = vst [vmem:[#allocation2 + $0xd8] sm:$0xff] %v312
  %348 = vst [vmem:[#allocation2 + $0xe0] sm:$0xff] %v203
  %349 = vst [vmem:[#allocation2 + $0xe8] sm:$0xff] %v205
  %350 = vst [vmem:[#allocation2 + $0xf0] sm:$0xff] %v316
  %351 = vst [vmem:[#allocation2 + $0xf8] sm:$0xff] %v318
  %v352 = vld [vmem:[#allocation3] sm:$0xff]
  %v353 = vld [vmem:[#allocation4] sm:$0xff]
  %v354 = vld [vmem:[#allocation2] sm:$0xff]
  %v355 = vld [vmem:[#allocation2 + $0x8] sm:$0xff]
  %v356 = vld [vmem:[#allocation2 + $0x10] sm:$0xff]
  %v357 = vld [vmem:[#allocation2 + $0x18] sm:$0xff]
  %v358 = vpack.c.bf16 %v352, %v352
  %v359 = vld [vmem:[%s2] sm:$0xff]
  %v360 = vld [vmem:[%s2 + $0x8] sm:$0xff]
  %v361 = vld [vmem:[%s2 + $0x10] sm:$0xff]
  %v362 = vld [vmem:[%s2 + $0x18] sm:$0xff]
  %v363 = vld [vmem:[%s2 + $0x20] sm:$0xff]
  %v364 = vld [vmem:[%s2 + $0x28] sm:$0xff]
  %v365 = vld [vmem:[%s2 + $0x30] sm:$0xff]
  %v366 = vld [vmem:[%s2 + $0x38] sm:$0xff]
  %v367 = vld [vmem:[%s2 + $0x40] sm:$0xff]
  %v368 = vld [vmem:[%s2 + $0x48] sm:$0xff]
  %v369 = vld [vmem:[%s2 + $0x50] sm:$0xff]
  %v370 = vld [vmem:[%s2 + $0x58] sm:$0xff]
  %v371 = vld [vmem:[%s2 + $0x60] sm:$0xff]
  %v372 = vld [vmem:[%s2 + $0x68] sm:$0xff]
  %v373 = vld [vmem:[%s2 + $0x70] sm:$0xff]
  %v374 = vld [vmem:[%s2 + $0x78] sm:$0xff]
  %v375 = vld [vmem:[%s2 + $0x80] sm:$0xff]
  %v376 = vld [vmem:[%s2 + $0x88] sm:$0xff]
  %v377 = vld [vmem:[%s2 + $0x90] sm:$0xff]
  %v378 = vld [vmem:[%s2 + $0x98] sm:$0xff]
  %v379 = vld [vmem:[%s2 + $0xa0] sm:$0xff]
  %v380 = vld [vmem:[%s2 + $0xa8] sm:$0xff]
  %v381 = vld [vmem:[%s2 + $0xb0] sm:$0xff]
  %v382 = vld [vmem:[%s2 + $0xb8] sm:$0xff]
  %v383 = vld [vmem:[%s2 + $0xc0] sm:$0xff]
  %v384 = vld [vmem:[%s2 + $0xc8] sm:$0xff]
  %v385 = vld [vmem:[%s2 + $0xd0] sm:$0xff]
  %v386 = vld [vmem:[%s2 + $0xd8] sm:$0xff]
  %v387 = vld [vmem:[%s2 + $0xe0] sm:$0xff]
  %v388 = vld [vmem:[%s2 + $0xe8] sm:$0xff]
  %v389 = vld [vmem:[%s2 + $0xf0] sm:$0xff]
  %v390 = vld [vmem:[%s2 + $0xf8] sm:$0xff]
  %v423 = vunpack.c.l.b16 %v359
  %v424 = vunpack.c.h.b16 %v359
  %v425 = vunpack.c.l.b16 %v360
  %v426 = vunpack.c.h.b16 %v360
  %v427 = vunpack.c.l.b16 %v361
  %v428 = vunpack.c.h.b16 %v361
  %v429 = vunpack.c.l.b16 %v362
  %v430 = vunpack.c.h.b16 %v362
  %v431 = vunpack.c.l.b16 %v363
  %v432 = vunpack.c.h.b16 %v363
  %v433 = vunpack.c.l.b16 %v364
  %v434 = vunpack.c.h.b16 %v364
  %v435 = vunpack.c.l.b16 %v365
  %v436 = vunpack.c.h.b16 %v365
  %v437 = vunpack.c.l.b16 %v366
  %v438 = vunpack.c.h.b16 %v366
  %v439 = vunpack.c.l.b16 %v367
  %v440 = vunpack.c.h.b16 %v367
  %v441 = vunpack.c.l.b16 %v368
  %v442 = vunpack.c.h.b16 %v368
  %v443 = vunpack.c.l.b16 %v369
  %v444 = vunpack.c.h.b16 %v369
  %v445 = vunpack.c.l.b16 %v370
  %v446 = vunpack.c.h.b16 %v370
  %v447 = vunpack.c.l.b16 %v371
  %v448 = vunpack.c.h.b16 %v371
  %v449 = vunpack.c.l.b16 %v372
  %v450 = vunpack.c.h.b16 %v372
  %v451 = vunpack.c.l.b16 %v373
  %v452 = vunpack.c.h.b16 %v373
  %v453 = vunpack.c.l.b16 %v374
  %v454 = vunpack.c.h.b16 %v374
  %v455 = vunpack.c.l.b16 %v375
  %v456 = vunpack.c.h.b16 %v375
  %v457 = vunpack.c.l.b16 %v376
  %v458 = vunpack.c.h.b16 %v376
  %v459 = vunpack.c.l.b16 %v377
  %v460 = vunpack.c.h.b16 %v377
  %v461 = vunpack.c.l.b16 %v378
  %v462 = vunpack.c.h.b16 %v378
  %v463 = vunpack.c.l.b16 %v379
  %v464 = vunpack.c.h.b16 %v379
  %v465 = vunpack.c.l.b16 %v380
  %v466 = vunpack.c.h.b16 %v380
  %v467 = vunpack.c.l.b16 %v381
  %v468 = vunpack.c.h.b16 %v381
  %v469 = vunpack.c.l.b16 %v382
  %v470 = vunpack.c.h.b16 %v382
  %v471 = vunpack.c.l.b16 %v383
  %v472 = vunpack.c.h.b16 %v383
  %v473 = vunpack.c.l.b16 %v384
  %v474 = vunpack.c.h.b16 %v384
  %v475 = vunpack.c.l.b16 %v385
  %v476 = vunpack.c.h.b16 %v385
  %v477 = vunpack.c.l.b16 %v386
  %v478 = vunpack.c.h.b16 %v386
  %v479 = vunpack.c.l.b16 %v387
  %v480 = vunpack.c.h.b16 %v387
  %v481 = vunpack.c.l.b16 %v388
  %v482 = vunpack.c.h.b16 %v388
  %v483 = vunpack.c.l.b16 %v389
  %v484 = vunpack.c.h.b16 %v389
  %v485 = vunpack.c.l.b16 %v390
  %v486 = vunpack.c.h.b16 %v390
  %v487 = vpack.c.b16 %v427, %v423
  %v488 = vpack.c.b16 %v428, %v424
  %v489 = vpack.c.b16 %v429, %v425
  %v490 = vpack.c.b16 %v430, %v426
  %v491 = vpack.c.b16 %v435, %v431
  %v492 = vpack.c.b16 %v436, %v432
  %v493 = vpack.c.b16 %v437, %v433
  %v494 = vpack.c.b16 %v438, %v434
  %v495 = vpack.c.b16 %v443, %v439
  %v496 = vpack.c.b16 %v444, %v440
  %v497 = vpack.c.b16 %v445, %v441
  %v498 = vpack.c.b16 %v446, %v442
  %v499 = vpack.c.b16 %v451, %v447
  %v500 = vpack.c.b16 %v452, %v448
  %v501 = vpack.c.b16 %v453, %v449
  %v502 = vpack.c.b16 %v454, %v450
  %v503 = vpack.c.b16 %v459, %v455
  %v504 = vpack.c.b16 %v460, %v456
  %v505 = vpack.c.b16 %v461, %v457
  %v506 = vpack.c.b16 %v462, %v458
  %v507 = vpack.c.b16 %v467, %v463
  %v508 = vpack.c.b16 %v468, %v464
  %v509 = vpack.c.b16 %v469, %v465
  %v510 = vpack.c.b16 %v470, %v466
  %v511 = vpack.c.b16 %v475, %v471
  %v512 = vpack.c.b16 %v476, %v472
  %v513 = vpack.c.b16 %v477, %v473
  %v514 = vpack.c.b16 %v478, %v474
  %v515 = vpack.c.b16 %v483, %v479
  %v516 = vpack.c.b16 %v484, %v480
  %v517 = vpack.c.b16 %v485, %v481
  %v518 = vpack.c.b16 %v486, %v482
  %551 = vmatprep.subr.bf16.mxu0 %v516
  %552 = vmatpush1.bf16.msra.mxu0 %v515
  %553 = vmatprep.subr.bf16.mxu0 %v512
  %554 = vmatpush1.bf16.msra.mxu0 %v511
  %555 = vmatprep.subr.bf16.mxu0 %v508
  %556 = vmatpush1.bf16.msra.mxu0 %v507
  %557 = vmatprep.subr.bf16.mxu0 %v504
  %558 = vmatpush1.bf16.msra.mxu0 %v503
  %559 = vmatprep.subr.bf16.mxu0 %v500
  %560 = vmatpush1.bf16.msra.mxu0 %v499
  %561 = vmatprep.subr.bf16.mxu0 %v496
  %562 = vmatpush1.bf16.msra.mxu0 %v495
  %563 = vmatprep.subr.bf16.mxu0 %v492
  %564 = vmatpush1.bf16.msra.mxu0 %v491
  %565 = vmatprep.subr.bf16.mxu0 %v488
  %566 = vmatpush1.bf16.msra.mxu0 %v487
  %567 = vmatprep.subr.bf16.mxu0 0
  %568 = vmatpush2.bf16.msra.mxu0 0
  %569 = vmatprep.subr.bf16.mxu0 0
  %570 = vmatpush2.bf16.msra.mxu0 0
  %571 = vmatprep.subr.bf16.mxu0 0
  %572 = vmatpush2.bf16.msra.mxu0 0
  %573 = vmatprep.subr.bf16.mxu0 0
  %574 = vmatpush2.bf16.msra.mxu0 0
  %575 = vmatprep.subr.bf16.mxu0 0
  %576 = vmatpush2.bf16.msra.mxu0 0
  %577 = vmatprep.subr.bf16.mxu0 0
  %578 = vmatpush2.bf16.msra.mxu0 0
  %579 = vmatprep.subr.bf16.mxu0 0
  %580 = vmatpush2.bf16.msra.mxu0 0
  %581 = vmatprep.subr.bf16.mxu0 0
  %582 = vmatpush2.bf16.msra.mxu0 0
  %583 = vmatprep.mubr.bf16.mxu0 0
  %584 = vmatmul.mubr.bf16.gmra.mxu0 %v358
  %v585 = vpop.f32.mrf.mxu0
  %v586 = vadd.f32 0.0, %v585
  %v587 = vpop.f32.mrf.mxu0
  %v588 = vadd.f32 0.0, %v587
  %v589 = vpop.f32.mrf.mxu0
  %v590 = vpop.f32.mrf.mxu0
  %591 = vdwg.mxu0
  %592 = vmatprep.subr.bf16.mxu0 %v518
  %593 = vmatpush1.bf16.msra.mxu0 %v517
  %594 = vmatprep.subr.bf16.mxu0 %v514
  %595 = vmatpush1.bf16.msra.mxu0 %v513
  %596 = vmatprep.subr.bf16.mxu0 %v510
  %597 = vmatpush1.bf16.msra.mxu0 %v509
  %598 = vmatprep.subr.bf16.mxu0 %v506
  %599 = vmatpush1.bf16.msra.mxu0 %v505
  %600 = vmatprep.subr.bf16.mxu0 %v502
  %601 = vmatpush1.bf16.msra.mxu0 %v501
  %602 = vmatprep.subr.bf16.mxu0 %v498
  %603 = vmatpush1.bf16.msra.mxu0 %v497
  %604 = vmatprep.subr.bf16.mxu0 %v494
  %605 = vmatpush1.bf16.msra.mxu0 %v493
  %606 = vmatprep.subr.bf16.mxu0 %v490
  %607 = vmatpush1.bf16.msra.mxu0 %v489
  %608 = vmatprep.subr.bf16.mxu0 0
  %609 = vmatpush2.bf16.msra.mxu0 0
  %610 = vmatprep.subr.bf16.mxu0 0
  %611 = vmatpush2.bf16.msra.mxu0 0
  %612 = vmatprep.subr.bf16.mxu0 0
  %613 = vmatpush2.bf16.msra.mxu0 0
  %614 = vmatprep.subr.bf16.mxu0 0
  %615 = vmatpush2.bf16.msra.mxu0 0
  %616 = vmatprep.subr.bf16.mxu0 0
  %617 = vmatpush2.bf16.msra.mxu0 0
  %618 = vmatprep.subr.bf16.mxu0 0
  %619 = vmatpush2.bf16.msra.mxu0 0
  %620 = vmatprep.subr.bf16.mxu0 0
  %621 = vmatpush2.bf16.msra.mxu0 0
  %622 = vmatprep.subr.bf16.mxu0 0
  %623 = vmatpush2.bf16.msra.mxu0 0
  %624 = vmatprep.mubr.bf16.mxu0 0
  %625 = vmatmul.mubr.bf16.gmra.mxu0 %v358
  %v626 = vpop.f32.mrf.mxu0
  %v627 = vadd.f32 0.0, %v626
  %v628 = vpop.f32.mrf.mxu0
  %v629 = vadd.f32 0.0, %v628
  %v630 = vpop.f32.mrf.mxu0
  %v631 = vpop.f32.mrf.mxu0
  %632 = vdwg.mxu0
  %v633 = vadd.f32 %v354, %v586
  %v634 = vadd.f32 %v355, %v588
  %v635 = vadd.f32 %v356, %v627
  %v636 = vadd.f32 %v357, %v629
  %v637 = vmul.f32 %v633, 0.5
  %v638 = vmul.f32 %v634, 0.5
  %v639 = vtanh.pop %v637
  %v640 = vtanh.pop %v638
  %v641 = vmul.f32 %v639, 0.5
  %v642 = vmul.f32 %v640, 0.5
  %v643 = vadd.f32 %v641, 0.5
  %v644 = vadd.f32 %v642, 0.5
  %v645 = vtanh.pop %v635
  %v646 = vmul.f32 %v636, 0.5
  %v647 = vtanh.pop %v646
  %v648 = vmul.f32 %v647, 0.5
  %v649 = vadd.f32 %v648, 0.5
  %v650 = vmul.f32 %v644, %v353
  %v651 = vmul.f32 %v643, %v645
  %v652 = vadd.f32 %v650, %v651
  %v653 = vtanh.pop %v652
  %v654 = vmul.f32 %v649, %v653
  %s655 = scalar_lea.vmem [#allocation2], 32
  %v656 = vld [vmem:[%s655] sm:$0xff]
  %v657 = vld [vmem:[%s655 + $0x8] sm:$0xff]
  %v658 = vld [vmem:[%s655 + $0x10] sm:$0xff]
  %v659 = vld [vmem:[%s655 + $0x18] sm:$0xff]
  %v660 = vpack.c.bf16 %v654, %v654
  %661 = vmatprep.subr.bf16.mxu0 %v516
  %662 = vmatpush1.bf16.msra.mxu0 %v515
  %663 = vmatprep.subr.bf16.mxu0 %v512
  %664 = vmatpush1.bf16.msra.mxu0 %v511
  %665 = vmatprep.subr.bf16.mxu0 %v508
  %666 = vmatpush1.bf16.msra.mxu0 %v507
  %667 = vmatprep.subr.bf16.mxu0 %v504
  %668 = vmatpush1.bf16.msra.mxu0 %v503
  %669 = vmatprep.subr.bf16.mxu0 %v500
  %670 = vmatpush1.bf16.msra.mxu0 %v499
  %671 = vmatprep.subr.bf16.mxu0 %v496
  %672 = vmatpush1.bf16.msra.mxu0 %v495
  %673 = vmatprep.subr.bf16.mxu0 %v492
  %674 = vmatpush1.bf16.msra.mxu0 %v491
  %675 = vmatprep.subr.bf16.mxu0 %v488
  %676 = vmatpush1.bf16.msra.mxu0 %v487
  %677 = vmatprep.subr.bf16.mxu0 0
  %678 = vmatpush2.bf16.msra.mxu0 0
  %679 = vmatprep.subr.bf16.mxu0 0
  %680 = vmatpush2.bf16.msra.mxu0 0
  %681 = vmatprep.subr.bf16.mxu0 0
  %682 = vmatpush2.bf16.msra.mxu0 0
  %683 = vmatprep.subr.bf16.mxu0 0
  %684 = vmatpush2.bf16.msra.mxu0 0
  %685 = vmatprep.subr.bf16.mxu0 0
  %686 = vmatpush2.bf16.msra.mxu0 0
  %687 = vmatprep.subr.bf16.mxu0 0
  %688 = vmatpush2.bf16.msra.mxu0 0
  %689 = vmatprep.subr.bf16.mxu0 0
  %690 = vmatpush2.bf16.msra.mxu0 0
  %691 = vmatprep.subr.bf16.mxu0 0
  %692 = vmatpush2.bf16.msra.mxu0 0
  %693 = vmatprep.mubr.bf16.mxu0 0
  %694 = vmatmul.mubr.bf16.gmra.mxu0 %v660
  %v695 = vpop.f32.mrf.mxu0
  %v696 = vadd.f32 0.0, %v695
  %v697 = vpop.f32.mrf.mxu0
  %v698 = vadd.f32 0.0, %v697
  %v699 = vpop.f32.mrf.mxu0
  %v700 = vpop.f32.mrf.mxu0
  %701 = vdwg.mxu0
  %702 = vmatprep.subr.bf16.mxu0 %v518
  %703 = vmatpush1.bf16.msra.mxu0 %v517
  %704 = vmatprep.subr.bf16.mxu0 %v514
  %705 = vmatpush1.bf16.msra.mxu0 %v513
  %706 = vmatprep.subr.bf16.mxu0 %v510
  %707 = vmatpush1.bf16.msra.mxu0 %v509
  %708 = vmatprep.subr.bf16.mxu0 %v506
  %709 = vmatpush1.bf16.msra.mxu0 %v505
  %710 = vmatprep.subr.bf16.mxu0 %v502
  %711 = vmatpush1.bf16.msra.mxu0 %v501
  %712 = vmatprep.subr.bf16.mxu0 %v498
  %713 = vmatpush1.bf16.msra.mxu0 %v497
  %714 = vmatprep.subr.bf16.mxu0 %v494
  %715 = vmatpush1.bf16.msra.mxu0 %v493
  %716 = vmatprep.subr.bf16.mxu0 %v490
  %717 = vmatpush1.bf16.msra.mxu0 %v489
  %718 = vmatprep.subr.bf16.mxu0 0
  %719 = vmatpush2.bf16.msra.mxu0 0
  %720 = vmatprep.subr.bf16.mxu0 0
  %721 = vmatpush2.bf16.msra.mxu0 0
  %722 = vmatprep.subr.bf16.mxu0 0
  %723 = vmatpush2.bf16.msra.mxu0 0
  %724 = vmatprep.subr.bf16.mxu0 0
  %725 = vmatpush2.bf16.msra.mxu0 0
  %726 = vmatprep.subr.bf16.mxu0 0
  %727 = vmatpush2.bf16.msra.mxu0 0
  %728 = vmatprep.subr.bf16.mxu0 0
  %729 = vmatpush2.bf16.msra.mxu0 0
  %730 = vmatprep.subr.bf16.mxu0 0
  %731 = vmatpush2.bf16.msra.mxu0 0
  %732 = vmatprep.subr.bf16.mxu0 0
  %733 = vmatpush2.bf16.msra.mxu0 0
  %734 = vmatprep.mubr.bf16.mxu0 0
  %735 = vmatmul.mubr.bf16.gmra.mxu0 %v660
  %v736 = vpop.f32.mrf.mxu0
  %v737 = vadd.f32 0.0, %v736
  %v738 = vpop.f32.mrf.mxu0
  %v739 = vadd.f32 0.0, %v738
  %v740 = vpop.f32.mrf.mxu0
  %v741 = vpop.f32.mrf.mxu0
  %742 = vdwg.mxu0
  %v743 = vadd.f32 %v656, %v696
  %v744 = vadd.f32 %v657, %v698
  %v745 = vadd.f32 %v658, %v737
  %v746 = vadd.f32 %v659, %v739
  %v747 = vmul.f32 %v743, 0.5
  %v748 = vmul.f32 %v744, 0.5
  %v749 = vtanh.pop %v747
  %v750 = vtanh.pop %v748
  %v751 = vmul.f32 %v749, 0.5
  %v752 = vmul.f32 %v750, 0.5
  %v753 = vadd.f32 %v751, 0.5
  %v754 = vadd.f32 %v752, 0.5
  %v755 = vtanh.pop %v745
  %v756 = vmul.f32 %v746, 0.5
  %v757 = vtanh.pop %v756
  %v758 = vmul.f32 %v757, 0.5
  %v759 = vadd.f32 %v758, 0.5
  %v760 = vmul.f32 %v754, %v652
  %v761 = vmul.f32 %v753, %v755
  %v762 = vadd.f32 %v760, %v761
  %v763 = vtanh.pop %v762
  %v764 = vmul.f32 %v759, %v763
  %s765 = scalar_lea.vmem [#allocation2], 64
  %v766 = vld [vmem:[%s765] sm:$0xff]
  %v767 = vld [vmem:[%s765 + $0x8] sm:$0xff]
  %v768 = vld [vmem:[%s765 + $0x10] sm:$0xff]
  %v769 = vld [vmem:[%s765 + $0x18] sm:$0xff]
  %v770 = vpack.c.bf16 %v764, %v764
  %771 = vmatprep.subr.bf16.mxu0 %v516
  %772 = vmatpush1.bf16.msra.mxu0 %v515
  %773 = vmatprep.subr.bf16.mxu0 %v512
  %774 = vmatpush1.bf16.msra.mxu0 %v511
  %775 = vmatprep.subr.bf16.mxu0 %v508
  %776 = vmatpush1.bf16.msra.mxu0 %v507
  %777 = vmatprep.subr.bf16.mxu0 %v504
  %778 = vmatpush1.bf16.msra.mxu0 %v503
  %779 = vmatprep.subr.bf16.mxu0 %v500
  %780 = vmatpush1.bf16.msra.mxu0 %v499
  %781 = vmatprep.subr.bf16.mxu0 %v496
  %782 = vmatpush1.bf16.msra.mxu0 %v495
  %783 = vmatprep.subr.bf16.mxu0 %v492
  %784 = vmatpush1.bf16.msra.mxu0 %v491
  %785 = vmatprep.subr.bf16.mxu0 %v488
  %786 = vmatpush1.bf16.msra.mxu0 %v487
  %787 = vmatprep.subr.bf16.mxu0 0
  %788 = vmatpush2.bf16.msra.mxu0 0
  %789 = vmatprep.subr.bf16.mxu0 0
  %790 = vmatpush2.bf16.msra.mxu0 0
  %791 = vmatprep.subr.bf16.mxu0 0
  %792 = vmatpush2.bf16.msra.mxu0 0
  %793 = vmatprep.subr.bf16.mxu0 0
  %794 = vmatpush2.bf16.msra.mxu0 0
  %795 = vmatprep.subr.bf16.mxu0 0
  %796 = vmatpush2.bf16.msra.mxu0 0
  %797 = vmatprep.subr.bf16.mxu0 0
  %798 = vmatpush2.bf16.msra.mxu0 0
  %799 = vmatprep.subr.bf16.mxu0 0
  %800 = vmatpush2.bf16.msra.mxu0 0
  %801 = vmatprep.subr.bf16.mxu0 0
  %802 = vmatpush2.bf16.msra.mxu0 0
  %803 = vmatprep.mubr.bf16.mxu0 0
  %804 = vmatmul.mubr.bf16.gmra.mxu0 %v770
  %v805 = vpop.f32.mrf.mxu0
  %v806 = vadd.f32 0.0, %v805
  %v807 = vpop.f32.mrf.mxu0
  %v808 = vadd.f32 0.0, %v807
  %v809 = vpop.f32.mrf.mxu0
  %v810 = vpop.f32.mrf.mxu0
  %811 = vdwg.mxu0
  %812 = vmatprep.subr.bf16.mxu0 %v518
  %813 = vmatpush1.bf16.msra.mxu0 %v517
  %814 = vmatprep.subr.bf16.mxu0 %v514
  %815 = vmatpush1.bf16.msra.mxu0 %v513
  %816 = vmatprep.subr.bf16.mxu0 %v510
  %817 = vmatpush1.bf16.msra.mxu0 %v509
  %818 = vmatprep.subr.bf16.mxu0 %v506
  %819 = vmatpush1.bf16.msra.mxu0 %v505
  %820 = vmatprep.subr.bf16.mxu0 %v502
  %821 = vmatpush1.bf16.msra.mxu0 %v501
  %822 = vmatprep.subr.bf16.mxu0 %v498
  %823 = vmatpush1.bf16.msra.mxu0 %v497
  %824 = vmatprep.subr.bf16.mxu0 %v494
  %825 = vmatpush1.bf16.msra.mxu0 %v493
  %826 = vmatprep.subr.bf16.mxu0 %v490
  %827 = vmatpush1.bf16.msra.mxu0 %v489
  %828 = vmatprep.subr.bf16.mxu0 0
  %829 = vmatpush2.bf16.msra.mxu0 0
  %830 = vmatprep.subr.bf16.mxu0 0
  %831 = vmatpush2.bf16.msra.mxu0 0
  %832 = vmatprep.subr.bf16.mxu0 0
  %833 = vmatpush2.bf16.msra.mxu0 0
  %834 = vmatprep.subr.bf16.mxu0 0
  %835 = vmatpush2.bf16.msra.mxu0 0
  %836 = vmatprep.subr.bf16.mxu0 0
  %837 = vmatpush2.bf16.msra.mxu0 0
  %838 = vmatprep.subr.bf16.mxu0 0
  %839 = vmatpush2.bf16.msra.mxu0 0
  %840 = vmatprep.subr.bf16.mxu0 0
  %841 = vmatpush2.bf16.msra.mxu0 0
  %842 = vmatprep.subr.bf16.mxu0 0
  %843 = vmatpush2.bf16.msra.mxu0 0
  %844 = vmatprep.mubr.bf16.mxu0 0
  %845 = vmatmul.mubr.bf16.gmra.mxu0 %v770
  %v846 = vpop.f32.mrf.mxu0
  %v847 = vadd.f32 0.0, %v846
  %v848 = vpop.f32.mrf.mxu0
  %v849 = vadd.f32 0.0, %v848
  %v850 = vpop.f32.mrf.mxu0
  %v851 = vpop.f32.mrf.mxu0
  %852 = vdwg.mxu0
  %v853 = vadd.f32 %v766, %v806
  %v854 = vadd.f32 %v767, %v808
  %v855 = vadd.f32 %v768, %v847
  %v856 = vadd.f32 %v769, %v849
  %v857 = vmul.f32 %v853, 0.5
  %v858 = vmul.f32 %v854, 0.5
  %v859 = vtanh.pop %v857
  %v860 = vtanh.pop %v858
  %v861 = vmul.f32 %v859, 0.5
  %v862 = vmul.f32 %v860, 0.5
  %v863 = vadd.f32 %v861, 0.5
  %v864 = vadd.f32 %v862, 0.5
  %v865 = vtanh.pop %v855
  %v866 = vmul.f32 %v856, 0.5
  %v867 = vtanh.pop %v866
  %v868 = vmul.f32 %v867, 0.5
  %v869 = vadd.f32 %v868, 0.5
  %v870 = vmul.f32 %v864, %v762
  %v871 = vmul.f32 %v863, %v865
  %v872 = vadd.f32 %v870, %v871
  %v873 = vtanh.pop %v872
  %v874 = vmul.f32 %v869, %v873
  %s875 = scalar_lea.vmem [#allocation2], 96
  %v876 = vld [vmem:[%s875] sm:$0xff]
  %v877 = vld [vmem:[%s875 + $0x8] sm:$0xff]
  %v878 = vld [vmem:[%s875 + $0x10] sm:$0xff]
  %v879 = vld [vmem:[%s875 + $0x18] sm:$0xff]
  %v880 = vpack.c.bf16 %v874, %v874
  %881 = vmatprep.subr.bf16.mxu0 %v516
  %882 = vmatpush1.bf16.msra.mxu0 %v515
  %883 = vmatprep.subr.bf16.mxu0 %v512
  %884 = vmatpush1.bf16.msra.mxu0 %v511
  %885 = vmatprep.subr.bf16.mxu0 %v508
  %886 = vmatpush1.bf16.msra.mxu0 %v507
  %887 = vmatprep.subr.bf16.mxu0 %v504
  %888 = vmatpush1.bf16.msra.mxu0 %v503
  %889 = vmatprep.subr.bf16.mxu0 %v500
  %890 = vmatpush1.bf16.msra.mxu0 %v499
  %891 = vmatprep.subr.bf16.mxu0 %v496
  %892 = vmatpush1.bf16.msra.mxu0 %v495
  %893 = vmatprep.subr.bf16.mxu0 %v492
  %894 = vmatpush1.bf16.msra.mxu0 %v491
  %895 = vmatprep.subr.bf16.mxu0 %v488
  %896 = vmatpush1.bf16.msra.mxu0 %v487
  %897 = vmatprep.subr.bf16.mxu0 0
  %898 = vmatpush2.bf16.msra.mxu0 0
  %899 = vmatprep.subr.bf16.mxu0 0
  %900 = vmatpush2.bf16.msra.mxu0 0
  %901 = vmatprep.subr.bf16.mxu0 0
  %902 = vmatpush2.bf16.msra.mxu0 0
  %903 = vmatprep.subr.bf16.mxu0 0
  %904 = vmatpush2.bf16.msra.mxu0 0
  %905 = vmatprep.subr.bf16.mxu0 0
  %906 = vmatpush2.bf16.msra.mxu0 0
  %907 = vmatprep.subr.bf16.mxu0 0
  %908 = vmatpush2.bf16.msra.mxu0 0
  %909 = vmatprep.subr.bf16.mxu0 0
  %910 = vmatpush2.bf16.msra.mxu0 0
  %911 = vmatprep.subr.bf16.mxu0 0
  %912 = vmatpush2.bf16.msra.mxu0 0
  %913 = vmatprep.mubr.bf16.mxu0 0
  %914 = vmatmul.mubr.bf16.gmra.mxu0 %v880
  %v915 = vpop.f32.mrf.mxu0
  %v916 = vadd.f32 0.0, %v915
  %v917 = vpop.f32.mrf.mxu0
  %v918 = vadd.f32 0.0, %v917
  %v919 = vpop.f32.mrf.mxu0
  %v920 = vpop.f32.mrf.mxu0
  %921 = vdwg.mxu0
  %922 = vmatprep.subr.bf16.mxu0 %v518
  %923 = vmatpush1.bf16.msra.mxu0 %v517
  %924 = vmatprep.subr.bf16.mxu0 %v514
  %925 = vmatpush1.bf16.msra.mxu0 %v513
  %926 = vmatprep.subr.bf16.mxu0 %v510
  %927 = vmatpush1.bf16.msra.mxu0 %v509
  %928 = vmatprep.subr.bf16.mxu0 %v506
  %929 = vmatpush1.bf16.msra.mxu0 %v505
  %930 = vmatprep.subr.bf16.mxu0 %v502
  %931 = vmatpush1.bf16.msra.mxu0 %v501
  %932 = vmatprep.subr.bf16.mxu0 %v498
  %933 = vmatpush1.bf16.msra.mxu0 %v497
  %934 = vmatprep.subr.bf16.mxu0 %v494
  %935 = vmatpush1.bf16.msra.mxu0 %v493
  %936 = vmatprep.subr.bf16.mxu0 %v490
  %937 = vmatpush1.bf16.msra.mxu0 %v489
  %938 = vmatprep.subr.bf16.mxu0 0
  %939 = vmatpush2.bf16.msra.mxu0 0
  %940 = vmatprep.subr.bf16.mxu0 0
  %941 = vmatpush2.bf16.msra.mxu0 0
  %942 = vmatprep.subr.bf16.mxu0 0
  %943 = vmatpush2.bf16.msra.mxu0 0
  %944 = vmatprep.subr.bf16.mxu0 0
  %945 = vmatpush2.bf16.msra.mxu0 0
  %946 = vmatprep.subr.bf16.mxu0 0
  %947 = vmatpush2.bf16.msra.mxu0 0
  %948 = vmatprep.subr.bf16.mxu0 0
  %949 = vmatpush2.bf16.msra.mxu0 0
  %950 = vmatprep.subr.bf16.mxu0 0
  %951 = vmatpush2.bf16.msra.mxu0 0
  %952 = vmatprep.subr.bf16.mxu0 0
  %953 = vmatpush2.bf16.msra.mxu0 0
  %954 = vmatprep.mubr.bf16.mxu0 0
  %955 = vmatmul.mubr.bf16.gmra.mxu0 %v880
  %v956 = vpop.f32.mrf.mxu0
  %v957 = vadd.f32 0.0, %v956
  %v958 = vpop.f32.mrf.mxu0
  %v959 = vadd.f32 0.0, %v958
  %v960 = vpop.f32.mrf.mxu0
  %v961 = vpop.f32.mrf.mxu0
  %962 = vdwg.mxu0
  %v963 = vadd.f32 %v876, %v916
  %v964 = vadd.f32 %v877, %v918
  %v965 = vadd.f32 %v878, %v957
  %v966 = vadd.f32 %v879, %v959
  %v967 = vmul.f32 %v963, 0.5
  %v968 = vmul.f32 %v964, 0.5
  %v969 = vtanh.pop %v967
  %v970 = vtanh.pop %v968
  %v971 = vmul.f32 %v969, 0.5
  %v972 = vmul.f32 %v970, 0.5
  %v973 = vadd.f32 %v971, 0.5
  %v974 = vadd.f32 %v972, 0.5
  %v975 = vtanh.pop %v965
  %v976 = vmul.f32 %v966, 0.5
  %v977 = vtanh.pop %v976
  %v978 = vmul.f32 %v977, 0.5
  %v979 = vadd.f32 %v978, 0.5
  %v980 = vmul.f32 %v974, %v872
  %v981 = vmul.f32 %v973, %v975
  %v982 = vadd.f32 %v980, %v981
  %v983 = vtanh.pop %v982
  %v984 = vmul.f32 %v979, %v983
  %s985 = scalar_lea.vmem [#allocation2], 128
  %v986 = vld [vmem:[%s985] sm:$0xff]
  %v987 = vld [vmem:[%s985 + $0x8] sm:$0xff]
  %v988 = vld [vmem:[%s985 + $0x10] sm:$0xff]
  %v989 = vld [vmem:[%s985 + $0x18] sm:$0xff]
  %v990 = vpack.c.bf16 %v984, %v984
  %991 = vmatprep.subr.bf16.mxu0 %v516
  %992 = vmatpush1.bf16.msra.mxu0 %v515
  %993 = vmatprep.subr.bf16.mxu0 %v512
  %994 = vmatpush1.bf16.msra.mxu0 %v511
  %995 = vmatprep.subr.bf16.mxu0 %v508
  %996 = vmatpush1.bf16.msra.mxu0 %v507
  %997 = vmatprep.subr.bf16.mxu0 %v504
  %998 = vmatpush1.bf16.msra.mxu0 %v503
  %999 = vmatprep.subr.bf16.mxu0 %v500
  %1000 = vmatpush1.bf16.msra.mxu0 %v499
  %1001 = vmatprep.subr.bf16.mxu0 %v496
  %1002 = vmatpush1.bf16.msra.mxu0 %v495
  %1003 = vmatprep.subr.bf16.mxu0 %v492
  %1004 = vmatpush1.bf16.msra.mxu0 %v491
  %1005 = vmatprep.subr.bf16.mxu0 %v488
  %1006 = vmatpush1.bf16.msra.mxu0 %v487
  %1007 = vmatprep.subr.bf16.mxu0 0
  %1008 = vmatpush2.bf16.msra.mxu0 0
  %1009 = vmatprep.subr.bf16.mxu0 0
  %1010 = vmatpush2.bf16.msra.mxu0 0
  %1011 = vmatprep.subr.bf16.mxu0 0
  %1012 = vmatpush2.bf16.msra.mxu0 0
  %1013 = vmatprep.subr.bf16.mxu0 0
  %1014 = vmatpush2.bf16.msra.mxu0 0
  %1015 = vmatprep.subr.bf16.mxu0 0
  %1016 = vmatpush2.bf16.msra.mxu0 0
  %1017 = vmatprep.subr.bf16.mxu0 0
  %1018 = vmatpush2.bf16.msra.mxu0 0
  %1019 = vmatprep.subr.bf16.mxu0 0
  %1020 = vmatpush2.bf16.msra.mxu0 0
  %1021 = vmatprep.subr.bf16.mxu0 0
  %1022 = vmatpush2.bf16.msra.mxu0 0
  %1023 = vmatprep.mubr.bf16.mxu0 0
  %1024 = vmatmul.mubr.bf16.gmra.mxu0 %v990
  %v1025 = vpop.f32.mrf.mxu0
  %v1026 = vadd.f32 0.0, %v1025
  %v1027 = vpop.f32.mrf.mxu0
  %v1028 = vadd.f32 0.0, %v1027
  %v1029 = vpop.f32.mrf.mxu0
  %v1030 = vpop.f32.mrf.mxu0
  %1031 = vdwg.mxu0
  %1032 = vmatprep.subr.bf16.mxu0 %v518
  %1033 = vmatpush1.bf16.msra.mxu0 %v517
  %1034 = vmatprep.subr.bf16.mxu0 %v514
  %1035 = vmatpush1.bf16.msra.mxu0 %v513
  %1036 = vmatprep.subr.bf16.mxu0 %v510
  %1037 = vmatpush1.bf16.msra.mxu0 %v509
  %1038 = vmatprep.subr.bf16.mxu0 %v506
  %1039 = vmatpush1.bf16.msra.mxu0 %v505
  %1040 = vmatprep.subr.bf16.mxu0 %v502
  %1041 = vmatpush1.bf16.msra.mxu0 %v501
  %1042 = vmatprep.subr.bf16.mxu0 %v498
  %1043 = vmatpush1.bf16.msra.mxu0 %v497
  %1044 = vmatprep.subr.bf16.mxu0 %v494
  %1045 = vmatpush1.bf16.msra.mxu0 %v493
  %1046 = vmatprep.subr.bf16.mxu0 %v490
  %1047 = vmatpush1.bf16.msra.mxu0 %v489
  %1048 = vmatprep.subr.bf16.mxu0 0
  %1049 = vmatpush2.bf16.msra.mxu0 0
  %1050 = vmatprep.subr.bf16.mxu0 0
  %1051 = vmatpush2.bf16.msra.mxu0 0
  %1052 = vmatprep.subr.bf16.mxu0 0
  %1053 = vmatpush2.bf16.msra.mxu0 0
  %1054 = vmatprep.subr.bf16.mxu0 0
  %1055 = vmatpush2.bf16.msra.mxu0 0
  %1056 = vmatprep.subr.bf16.mxu0 0
  %1057 = vmatpush2.bf16.msra.mxu0 0
  %1058 = vmatprep.subr.bf16.mxu0 0
  %1059 = vmatpush2.bf16.msra.mxu0 0
  %1060 = vmatprep.subr.bf16.mxu0 0
  %1061 = vmatpush2.bf16.msra.mxu0 0
  %1062 = vmatprep.subr.bf16.mxu0 0
  %1063 = vmatpush2.bf16.msra.mxu0 0
  %1064 = vmatprep.mubr.bf16.mxu0 0
  %1065 = vmatmul.mubr.bf16.gmra.mxu0 %v990
  %v1066 = vpop.f32.mrf.mxu0
  %v1067 = vadd.f32 0.0, %v1066
  %v1068 = vpop.f32.mrf.mxu0
  %v1069 = vadd.f32 0.0, %v1068
  %v1070 = vpop.f32.mrf.mxu0
  %v1071 = vpop.f32.mrf.mxu0
  %1072 = vdwg.mxu0
  %v1073 = vadd.f32 %v986, %v1026
  %v1074 = vadd.f32 %v987, %v1028
  %v1075 = vadd.f32 %v988, %v1067
  %v1076 = vadd.f32 %v989, %v1069
  %v1077 = vmul.f32 %v1073, 0.5
  %v1078 = vmul.f32 %v1074, 0.5
  %v1079 = vtanh.pop %v1077
  %v1080 = vtanh.pop %v1078
  %v1081 = vmul.f32 %v1079, 0.5
  %v1082 = vmul.f32 %v1080, 0.5
  %v1083 = vadd.f32 %v1081, 0.5
  %v1084 = vadd.f32 %v1082, 0.5
  %v1085 = vtanh.pop %v1075
  %v1086 = vmul.f32 %v1076, 0.5
  %v1087 = vtanh.pop %v1086
  %v1088 = vmul.f32 %v1087, 0.5
  %v1089 = vadd.f32 %v1088, 0.5
  %v1090 = vmul.f32 %v1084, %v982
  %v1091 = vmul.f32 %v1083, %v1085
  %v1092 = vadd.f32 %v1090, %v1091
  %v1093 = vtanh.pop %v1092
  %v1094 = vmul.f32 %v1089, %v1093
  %s1095 = scalar_lea.vmem [#allocation2], 160
  %v1096 = vld [vmem:[%s1095] sm:$0xff]
  %v1097 = vld [vmem:[%s1095 + $0x8] sm:$0xff]
  %v1098 = vld [vmem:[%s1095 + $0x10] sm:$0xff]
  %v1099 = vld [vmem:[%s1095 + $0x18] sm:$0xff]
  %v1100 = vpack.c.bf16 %v1094, %v1094
  %1101 = vmatprep.subr.bf16.mxu0 %v516
  %1102 = vmatpush1.bf16.msra.mxu0 %v515
  %1103 = vmatprep.subr.bf16.mxu0 %v512
  %1104 = vmatpush1.bf16.msra.mxu0 %v511
  %1105 = vmatprep.subr.bf16.mxu0 %v508
  %1106 = vmatpush1.bf16.msra.mxu0 %v507
  %1107 = vmatprep.subr.bf16.mxu0 %v504
  %1108 = vmatpush1.bf16.msra.mxu0 %v503
  %1109 = vmatprep.subr.bf16.mxu0 %v500
  %1110 = vmatpush1.bf16.msra.mxu0 %v499
  %1111 = vmatprep.subr.bf16.mxu0 %v496
  %1112 = vmatpush1.bf16.msra.mxu0 %v495
  %1113 = vmatprep.subr.bf16.mxu0 %v492
  %1114 = vmatpush1.bf16.msra.mxu0 %v491
  %1115 = vmatprep.subr.bf16.mxu0 %v488
  %1116 = vmatpush1.bf16.msra.mxu0 %v487
  %1117 = vmatprep.subr.bf16.mxu0 0
  %1118 = vmatpush2.bf16.msra.mxu0 0
  %1119 = vmatprep.subr.bf16.mxu0 0
  %1120 = vmatpush2.bf16.msra.mxu0 0
  %1121 = vmatprep.subr.bf16.mxu0 0
  %1122 = vmatpush2.bf16.msra.mxu0 0
  %1123 = vmatprep.subr.bf16.mxu0 0
  %1124 = vmatpush2.bf16.msra.mxu0 0
  %1125 = vmatprep.subr.bf16.mxu0 0
  %1126 = vmatpush2.bf16.msra.mxu0 0
  %1127 = vmatprep.subr.bf16.mxu0 0
  %1128 = vmatpush2.bf16.msra.mxu0 0
  %1129 = vmatprep.subr.bf16.mxu0 0
  %1130 = vmatpush2.bf16.msra.mxu0 0
  %1131 = vmatprep.subr.bf16.mxu0 0
  %1132 = vmatpush2.bf16.msra.mxu0 0
  %1133 = vmatprep.mubr.bf16.mxu0 0
  %1134 = vmatmul.mubr.bf16.gmra.mxu0 %v1100
  %v1135 = vpop.f32.mrf.mxu0
  %v1136 = vadd.f32 0.0, %v1135
  %v1137 = vpop.f32.mrf.mxu0
  %v1138 = vadd.f32 0.0, %v1137
  %v1139 = vpop.f32.mrf.mxu0
  %v1140 = vpop.f32.mrf.mxu0
  %1141 = vdwg.mxu0
  %1142 = vmatprep.subr.bf16.mxu0 %v518
  %1143 = vmatpush1.bf16.msra.mxu0 %v517
  %1144 = vmatprep.subr.bf16.mxu0 %v514
  %1145 = vmatpush1.bf16.msra.mxu0 %v513
  %1146 = vmatprep.subr.bf16.mxu0 %v510
  %1147 = vmatpush1.bf16.msra.mxu0 %v509
  %1148 = vmatprep.subr.bf16.mxu0 %v506
  %1149 = vmatpush1.bf16.msra.mxu0 %v505
  %1150 = vmatprep.subr.bf16.mxu0 %v502
  %1151 = vmatpush1.bf16.msra.mxu0 %v501
  %1152 = vmatprep.subr.bf16.mxu0 %v498
  %1153 = vmatpush1.bf16.msra.mxu0 %v497
  %1154 = vmatprep.subr.bf16.mxu0 %v494
  %1155 = vmatpush1.bf16.msra.mxu0 %v493
  %1156 = vmatprep.subr.bf16.mxu0 %v490
  %1157 = vmatpush1.bf16.msra.mxu0 %v489
  %1158 = vmatprep.subr.bf16.mxu0 0
  %1159 = vmatpush2.bf16.msra.mxu0 0
  %1160 = vmatprep.subr.bf16.mxu0 0
  %1161 = vmatpush2.bf16.msra.mxu0 0
  %1162 = vmatprep.subr.bf16.mxu0 0
  %1163 = vmatpush2.bf16.msra.mxu0 0
  %1164 = vmatprep.subr.bf16.mxu0 0
  %1165 = vmatpush2.bf16.msra.mxu0 0
  %1166 = vmatprep.subr.bf16.mxu0 0
  %1167 = vmatpush2.bf16.msra.mxu0 0
  %1168 = vmatprep.subr.bf16.mxu0 0
  %1169 = vmatpush2.bf16.msra.mxu0 0
  %1170 = vmatprep.subr.bf16.mxu0 0
  %1171 = vmatpush2.bf16.msra.mxu0 0
  %1172 = vmatprep.subr.bf16.mxu0 0
  %1173 = vmatpush2.bf16.msra.mxu0 0
  %1174 = vmatprep.mubr.bf16.mxu0 0
  %1175 = vmatmul.mubr.bf16.gmra.mxu0 %v1100
  %v1176 = vpop.f32.mrf.mxu0
  %v1177 = vadd.f32 0.0, %v1176
  %v1178 = vpop.f32.mrf.mxu0
  %v1179 = vadd.f32 0.0, %v1178
  %v1180 = vpop.f32.mrf.mxu0
  %v1181 = vpop.f32.mrf.mxu0
  %1182 = vdwg.mxu0
  %v1183 = vadd.f32 %v1096, %v1136
  %v1184 = vadd.f32 %v1097, %v1138
  %v1185 = vadd.f32 %v1098, %v1177
  %v1186 = vadd.f32 %v1099, %v1179
  %v1187 = vmul.f32 %v1183, 0.5
  %v1188 = vmul.f32 %v1184, 0.5
  %v1189 = vtanh.pop %v1187
  %v1190 = vtanh.pop %v1188
  %v1191 = vmul.f32 %v1189, 0.5
  %v1192 = vmul.f32 %v1190, 0.5
  %v1193 = vadd.f32 %v1191, 0.5
  %v1194 = vadd.f32 %v1192, 0.5
  %v1195 = vtanh.pop %v1185
  %v1196 = vmul.f32 %v1186, 0.5
  %v1197 = vtanh.pop %v1196
  %v1198 = vmul.f32 %v1197, 0.5
  %v1199 = vadd.f32 %v1198, 0.5
  %v1200 = vmul.f32 %v1194, %v1092
  %v1201 = vmul.f32 %v1193, %v1195
  %v1202 = vadd.f32 %v1200, %v1201
  %v1203 = vtanh.pop %v1202
  %v1204 = vmul.f32 %v1199, %v1203
  %s1205 = scalar_lea.vmem [#allocation2], 192
  %v1206 = vld [vmem:[%s1205] sm:$0xff]
  %v1207 = vld [vmem:[%s1205 + $0x8] sm:$0xff]
  %v1208 = vld [vmem:[%s1205 + $0x10] sm:$0xff]
  %v1209 = vld [vmem:[%s1205 + $0x18] sm:$0xff]
  %v1210 = vpack.c.bf16 %v1204, %v1204
  %1211 = vmatprep.subr.bf16.mxu0 %v516
  %1212 = vmatpush1.bf16.msra.mxu0 %v515
  %1213 = vmatprep.subr.bf16.mxu0 %v512
  %1214 = vmatpush1.bf16.msra.mxu0 %v511
  %1215 = vmatprep.subr.bf16.mxu0 %v508
  %1216 = vmatpush1.bf16.msra.mxu0 %v507
  %1217 = vmatprep.subr.bf16.mxu0 %v504
  %1218 = vmatpush1.bf16.msra.mxu0 %v503
  %1219 = vmatprep.subr.bf16.mxu0 %v500
  %1220 = vmatpush1.bf16.msra.mxu0 %v499
  %1221 = vmatprep.subr.bf16.mxu0 %v496
  %1222 = vmatpush1.bf16.msra.mxu0 %v495
  %1223 = vmatprep.subr.bf16.mxu0 %v492
  %1224 = vmatpush1.bf16.msra.mxu0 %v491
  %1225 = vmatprep.subr.bf16.mxu0 %v488
  %1226 = vmatpush1.bf16.msra.mxu0 %v487
  %1227 = vmatprep.subr.bf16.mxu0 0
  %1228 = vmatpush2.bf16.msra.mxu0 0
  %1229 = vmatprep.subr.bf16.mxu0 0
  %1230 = vmatpush2.bf16.msra.mxu0 0
  %1231 = vmatprep.subr.bf16.mxu0 0
  %1232 = vmatpush2.bf16.msra.mxu0 0
  %1233 = vmatprep.subr.bf16.mxu0 0
  %1234 = vmatpush2.bf16.msra.mxu0 0
  %1235 = vmatprep.subr.bf16.mxu0 0
  %1236 = vmatpush2.bf16.msra.mxu0 0
  %1237 = vmatprep.subr.bf16.mxu0 0
  %1238 = vmatpush2.bf16.msra.mxu0 0
  %1239 = vmatprep.subr.bf16.mxu0 0
  %1240 = vmatpush2.bf16.msra.mxu0 0
  %1241 = vmatprep.subr.bf16.mxu0 0
  %1242 = vmatpush2.bf16.msra.mxu0 0
  %1243 = vmatprep.mubr.bf16.mxu0 0
  %1244 = vmatmul.mubr.bf16.gmra.mxu0 %v1210
  %v1245 = vpop.f32.mrf.mxu0
  %v1246 = vadd.f32 0.0, %v1245
  %v1247 = vpop.f32.mrf.mxu0
  %v1248 = vadd.f32 0.0, %v1247
  %v1249 = vpop.f32.mrf.mxu0
  %v1250 = vpop.f32.mrf.mxu0
  %1251 = vdwg.mxu0
  %1252 = vmatprep.subr.bf16.mxu0 %v518
  %1253 = vmatpush1.bf16.msra.mxu0 %v517
  %1254 = vmatprep.subr.bf16.mxu0 %v514
  %1255 = vmatpush1.bf16.msra.mxu0 %v513
  %1256 = vmatprep.subr.bf16.mxu0 %v510
  %1257 = vmatpush1.bf16.msra.mxu0 %v509
  %1258 = vmatprep.subr.bf16.mxu0 %v506
  %1259 = vmatpush1.bf16.msra.mxu0 %v505
  %1260 = vmatprep.subr.bf16.mxu0 %v502
  %1261 = vmatpush1.bf16.msra.mxu0 %v501
  %1262 = vmatprep.subr.bf16.mxu0 %v498
  %1263 = vmatpush1.bf16.msra.mxu0 %v497
  %1264 = vmatprep.subr.bf16.mxu0 %v494
  %1265 = vmatpush1.bf16.msra.mxu0 %v493
  %1266 = vmatprep.subr.bf16.mxu0 %v490
  %1267 = vmatpush1.bf16.msra.mxu0 %v489
  %1268 = vmatprep.subr.bf16.mxu0 0
  %1269 = vmatpush2.bf16.msra.mxu0 0
  %1270 = vmatprep.subr.bf16.mxu0 0
  %1271 = vmatpush2.bf16.msra.mxu0 0
  %1272 = vmatprep.subr.bf16.mxu0 0
  %1273 = vmatpush2.bf16.msra.mxu0 0
  %1274 = vmatprep.subr.bf16.mxu0 0
  %1275 = vmatpush2.bf16.msra.mxu0 0
  %1276 = vmatprep.subr.bf16.mxu0 0
  %1277 = vmatpush2.bf16.msra.mxu0 0
  %1278 = vmatprep.subr.bf16.mxu0 0
  %1279 = vmatpush2.bf16.msra.mxu0 0
  %1280 = vmatprep.subr.bf16.mxu0 0
  %1281 = vmatpush2.bf16.msra.mxu0 0
  %1282 = vmatprep.subr.bf16.mxu0 0
  %1283 = vmatpush2.bf16.msra.mxu0 0
  %1284 = vmatprep.mubr.bf16.mxu0 0
  %1285 = vmatmul.mubr.bf16.gmra.mxu0 %v1210
  %v1286 = vpop.f32.mrf.mxu0
  %v1287 = vadd.f32 0.0, %v1286
  %v1288 = vpop.f32.mrf.mxu0
  %v1289 = vadd.f32 0.0, %v1288
  %v1290 = vpop.f32.mrf.mxu0
  %v1291 = vpop.f32.mrf.mxu0
  %1292 = vdwg.mxu0
  %v1293 = vadd.f32 %v1206, %v1246
  %v1294 = vadd.f32 %v1207, %v1248
  %v1295 = vadd.f32 %v1208, %v1287
  %v1296 = vadd.f32 %v1209, %v1289
  %v1297 = vmul.f32 %v1293, 0.5
  %v1298 = vmul.f32 %v1294, 0.5
  %v1299 = vtanh.pop %v1297
  %v1300 = vtanh.pop %v1298
  %v1301 = vmul.f32 %v1299, 0.5
  %v1302 = vmul.f32 %v1300, 0.5
  %v1303 = vadd.f32 %v1301, 0.5
  %v1304 = vadd.f32 %v1302, 0.5
  %v1305 = vtanh.pop %v1295
  %v1306 = vmul.f32 %v1296, 0.5
  %v1307 = vtanh.pop %v1306
  %v1308 = vmul.f32 %v1307, 0.5
  %v1309 = vadd.f32 %v1308, 0.5
  %v1310 = vmul.f32 %v1304, %v1202
  %v1311 = vmul.f32 %v1303, %v1305
  %v1312 = vadd.f32 %v1310, %v1311
  %v1313 = vtanh.pop %v1312
  %v1314 = vmul.f32 %v1309, %v1313
  %s1315 = scalar_lea.vmem [#allocation2], 224
  %v1316 = vld [vmem:[%s1315] sm:$0xff]
  %v1317 = vld [vmem:[%s1315 + $0x8] sm:$0xff]
  %v1318 = vld [vmem:[%s1315 + $0x10] sm:$0xff]
  %v1319 = vld [vmem:[%s1315 + $0x18] sm:$0xff]
  %v1320 = vpack.c.bf16 %v1314, %v1314
  %1321 = vmatprep.subr.bf16.mxu0 %v516
  %1322 = vmatpush1.bf16.msra.mxu0 %v515
  %1323 = vmatprep.subr.bf16.mxu0 %v512
  %1324 = vmatpush1.bf16.msra.mxu0 %v511
  %1325 = vmatprep.subr.bf16.mxu0 %v508
  %1326 = vmatpush1.bf16.msra.mxu0 %v507
  %1327 = vmatprep.subr.bf16.mxu0 %v504
  %1328 = vmatpush1.bf16.msra.mxu0 %v503
  %1329 = vmatprep.subr.bf16.mxu0 %v500
  %1330 = vmatpush1.bf16.msra.mxu0 %v499
  %1331 = vmatprep.subr.bf16.mxu0 %v496
  %1332 = vmatpush1.bf16.msra.mxu0 %v495
  %1333 = vmatprep.subr.bf16.mxu0 %v492
  %1334 = vmatpush1.bf16.msra.mxu0 %v491
  %1335 = vmatprep.subr.bf16.mxu0 %v488
  %1336 = vmatpush1.bf16.msra.mxu0 %v487
  %1337 = vmatprep.subr.bf16.mxu0 0
  %1338 = vmatpush2.bf16.msra.mxu0 0
  %1339 = vmatprep.subr.bf16.mxu0 0
  %1340 = vmatpush2.bf16.msra.mxu0 0
  %1341 = vmatprep.subr.bf16.mxu0 0
  %1342 = vmatpush2.bf16.msra.mxu0 0
  %1343 = vmatprep.subr.bf16.mxu0 0
  %1344 = vmatpush2.bf16.msra.mxu0 0
  %1345 = vmatprep.subr.bf16.mxu0 0
  %1346 = vmatpush2.bf16.msra.mxu0 0
  %1347 = vmatprep.subr.bf16.mxu0 0
  %1348 = vmatpush2.bf16.msra.mxu0 0
  %1349 = vmatprep.subr.bf16.mxu0 0
  %1350 = vmatpush2.bf16.msra.mxu0 0
  %1351 = vmatprep.subr.bf16.mxu0 0
  %1352 = vmatpush2.bf16.msra.mxu0 0
  %1353 = vmatprep.mubr.bf16.mxu0 0
  %1354 = vmatmul.mubr.bf16.gmra.mxu0 %v1320
  %v1355 = vpop.f32.mrf.mxu0
  %v1356 = vadd.f32 0.0, %v1355
  %v1357 = vpop.f32.mrf.mxu0
  %v1358 = vadd.f32 0.0, %v1357
  %v1359 = vpop.f32.mrf.mxu0
  %v1360 = vpop.f32.mrf.mxu0
  %1361 = vdwg.mxu0
  %1362 = vmatprep.subr.bf16.mxu0 %v518
  %1363 = vmatpush1.bf16.msra.mxu0 %v517
  %1364 = vmatprep.subr.bf16.mxu0 %v514
  %1365 = vmatpush1.bf16.msra.mxu0 %v513
  %1366 = vmatprep.subr.bf16.mxu0 %v510
  %1367 = vmatpush1.bf16.msra.mxu0 %v509
  %1368 = vmatprep.subr.bf16.mxu0 %v506
  %1369 = vmatpush1.bf16.msra.mxu0 %v505
  %1370 = vmatprep.subr.bf16.mxu0 %v502
  %1371 = vmatpush1.bf16.msra.mxu0 %v501
  %1372 = vmatprep.subr.bf16.mxu0 %v498
  %1373 = vmatpush1.bf16.msra.mxu0 %v497
  %1374 = vmatprep.subr.bf16.mxu0 %v494
  %1375 = vmatpush1.bf16.msra.mxu0 %v493
  %1376 = vmatprep.subr.bf16.mxu0 %v490
  %1377 = vmatpush1.bf16.msra.mxu0 %v489
  %1378 = vmatprep.subr.bf16.mxu0 0
  %1379 = vmatpush2.bf16.msra.mxu0 0
  %1380 = vmatprep.subr.bf16.mxu0 0
  %1381 = vmatpush2.bf16.msra.mxu0 0
  %1382 = vmatprep.subr.bf16.mxu0 0
  %1383 = vmatpush2.bf16.msra.mxu0 0
  %1384 = vmatprep.subr.bf16.mxu0 0
  %1385 = vmatpush2.bf16.msra.mxu0 0
  %1386 = vmatprep.subr.bf16.mxu0 0
  %1387 = vmatpush2.bf16.msra.mxu0 0
  %1388 = vmatprep.subr.bf16.mxu0 0
  %1389 = vmatpush2.bf16.msra.mxu0 0
  %1390 = vmatprep.subr.bf16.mxu0 0
  %1391 = vmatpush2.bf16.msra.mxu0 0
  %1392 = vmatprep.subr.bf16.mxu0 0
  %1393 = vmatpush2.bf16.msra.mxu0 0
  %1394 = vmatprep.mubr.bf16.mxu0 0
  %1395 = vmatmul.mubr.bf16.gmra.mxu0 %v1320
  %v1396 = vpop.f32.mrf.mxu0
  %v1397 = vadd.f32 0.0, %v1396
  %v1398 = vpop.f32.mrf.mxu0
  %v1399 = vadd.f32 0.0, %v1398
  %v1400 = vpop.f32.mrf.mxu0
  %v1401 = vpop.f32.mrf.mxu0
  %1402 = vdwg.mxu0
  %v1403 = vadd.f32 %v1316, %v1356
  %v1404 = vadd.f32 %v1317, %v1358
  %v1405 = vadd.f32 %v1318, %v1397
  %v1406 = vadd.f32 %v1319, %v1399
  %v1407 = vmul.f32 %v1403, 0.5
  %v1408 = vmul.f32 %v1404, 0.5
  %v1409 = vtanh.pop %v1407
  %v1410 = vtanh.pop %v1408
  %v1411 = vmul.f32 %v1409, 0.5
  %v1412 = vmul.f32 %v1410, 0.5
  %v1413 = vadd.f32 %v1411, 0.5
  %v1414 = vadd.f32 %v1412, 0.5
  %v1415 = vtanh.pop %v1405
  %v1416 = vmul.f32 %v1406, 0.5
  %v1417 = vtanh.pop %v1416
  %v1418 = vmul.f32 %v1417, 0.5
  %v1419 = vadd.f32 %v1418, 0.5
  %v1420 = vmul.f32 %v1414, %v1312
  %v1421 = vmul.f32 %v1413, %v1415
  %v1422 = vadd.f32 %v1420, %v1421
  %v1423 = vtanh.pop %v1422
  %v1424 = vmul.f32 %v1419, %v1423
  %1425 = vst [vmem:[#allocation3] sm:$0xff] %v1424
  %1426 = vst [vmem:[#allocation4] sm:$0xff] %v1422
  // Predicated region
  $region22: #{com_lstm_forward.1} parent=0 // pred_check
    %p1427 = pneg %p18
  $region23: #{com_lstm_forward.1} parent=0 // pred_check_branch
    %1429 = sbr.rel (%p1427) target = $region25
  $region24: #{com_lstm_forward.1} parent=0 // pred_region
    %v1430 = vld [vmem:[#allocation3] sm:$0xff]
    %1431 = vst [vmem:[%s4] sm:$0xff] %v1430
  $region25: #{com_lstm_forward.1} parent=0 // pred_fallthru
    _
  // Predicated region
  $region26: #{com_lstm_forward.1} parent=0 // pred_check
    _
  $region27: #{com_lstm_forward.1} parent=0 // pred_check_branch
    %1433 = sbr.rel (0) target = $region29
  $region28: #{com_lstm_forward.1} parent=0 // pred_region
    _
  $region29: #{com_lstm_forward.1} parent=0 // pred_fallthru
    _
  // Predicated region
  $region30: #{com_lstm_forward.1} parent=0 // pred_check
    _
  $region31: #{com_lstm_forward.1} parent=0 // pred_check_branch
    %1435 = sbr.rel (0) target = $region33
  $region32: #{com_lstm_forward.1} parent=0 // pred_region
    _
  $region33: #{com_lstm_forward.1} parent=0 // pred_fallthru
    _

</llo_original>
